<compile_context>
chip_gen: v5e
topology: v5e:2x2
jax: 0.10.0
libtpu: 0.0.40
codegen_flags: <defaults>
</compile_context>

<pallas_src>
import jax
import jax.numpy as jnp
from jax.experimental import pallas as pl
from jax.experimental.pallas import tpu as pltpu


# ----------------------------------------------------------------------------
# Fused Pallas kernel (one image per grid step, channels-major layout)
# ----------------------------------------------------------------------------
def _make_edsr_kernel(H, W, C, Cin, n_resblocks, res_scale, r, row_off):
    HW = H * W
    o_head, o_body, o_bt, o_up, o_tail = row_off

    def kernel(x_ref, msub_ref, wmat_ref, o_ref):
        # x_ref:    (1, C, HW)      channel-padded input image, channels-major
        # msub_ref: (C, 1)          data_mean (padded to C)
        # wmat_ref: (R, 9*C + 1)    all conv weights; last column = bias
        # o_ref:    (1, r*r*Cin, HW) sub-pixel-group-major output

        # Column-validity masks for horizontal taps (computed once per step).
        col = jax.lax.broadcasted_iota(jnp.int32, (1, HW), 1) % W
        m_left = (col >= 1).astype(jnp.float32)        # valid when dw == -1
        m_right = (col <= W - 2).astype(jnp.float32)   # valid when dw == +1
        ones_row = jnp.ones((1, HW), jnp.float32)      # bias row for im2col

        def make_padded(act):
            # Flat activation with one zero row of padding on each side (plus
            # one extra zero lane so every tap offset is non-negative).
            ch = act.shape[0]
            zp = jnp.zeros((ch, W + 1), jnp.float32)
            return jnp.concatenate([zp, act, zp], axis=1)   # (ch, HW + 2W + 2)

        def tap(ppad, dh, dw):
            # y[c, h*W+w] = act[c, (h+dh)*W + (w+dw)], zero outside the image.
            base = (dh + 1) * W + (dw + 1)
            y = ppad[:, base:base + HW]
            if dw > 0:
                y = y * m_right
            elif dw < 0:
                y = y * m_left
            return y

        def matmul(w_full, patches):
            return jax.lax.dot_general(
                w_full, patches,
                dimension_numbers=(((1,), (0,)), ((), ())),
                preferred_element_type=jnp.float32)

        def conv3x3(act, row0, cout):
            # One im2col matmul per conv: (cout, 9C+1) @ (9C+1, HW).
            w_full = wmat_ref[row0:row0 + cout, :]
            ppad = make_padded(act)
            rows = [tap(ppad, dh, dw) for dh in (-1, 0, 1) for dw in (-1, 0, 1)]
            patches = jnp.concatenate(rows + [ones_row], axis=0)
            return matmul(w_full, patches)

        # sub_mean (data_std == 1  =>  x - mean)
        x = x_ref[0].astype(jnp.float32) - msub_ref[...]          # (C, HW)

        # head conv
        feat = conv3x3(x, o_head, C)

        # body: ResBlocks (conv -> relu -> conv, residual-scaled add)
        res = feat
        for bi in range(n_resblocks):
            r0 = o_body + bi * 2 * C
            t = jnp.maximum(conv3x3(res, r0, C), 0.0)
            t = conv3x3(t, r0 + C, C)
            res = res + jnp.float32(res_scale) * t

        # body-tail conv + global skip (n_feats == tail_feats: shortcut is None)
        res = conv3x3(res, o_bt, C) + feat

        # upsampler conv (C -> r*r*C); output rows are sub-pixel-group-major.
        up = conv3x3(res, o_up, r * r * C)                        # (r*r*C, HW)

        # PixelShuffle + tail 3x3 conv evaluated directly in the sub-pixel
        # domain, fused with add_mean (folded into the bias column) and ReLU.
        # big[r*h+i, r*w+j] == sub_{i,j}[h, w]; so for output group (i,j) the
        # tap (dp,dq) reads sub_{(i+dp)%r,(j+dq)%r} shifted by the floor-divs.
        w_tail = wmat_ref[o_tail:o_tail + Cin, :]
        ppads = [make_padded(up[g * C:(g + 1) * C, :]) for g in range(r * r)]
        outs = []
        for i in range(r):
            for j in range(r):
                rows = []
                for dp in (-1, 0, 1):
                    ii, a = (i + dp) % r, (i + dp) // r
                    for dq in (-1, 0, 1):
                        jj, b = (j + dq) % r, (j + dq) // r
                        rows.append(tap(ppads[ii * r + jj], a, b))
                patches = jnp.concatenate(rows + [ones_row], axis=0)
                outs.append(jnp.maximum(matmul(w_tail, patches), 0.0))
        # Single lane-dense store of the whole (r*r*Cin, HW) output block.
        o_ref[0] = jnp.concatenate(outs, axis=0).astype(o_ref.dtype)

    return kernel


# ----------------------------------------------------------------------------
# Wrapper
# ----------------------------------------------------------------------------
def edsr_forward(x, params, data_mean, *, res_scale=0.1, scale=2):
    assert scale == 2, "only the single-stage (scale=2) Upsampler is implemented"
    # TODO(synk): n_feats != tail_feats (1x1 shortcut conv) and scale in {3,4}
    # (multi-stage Upsampler) are not implemented in the fused kernel.
    # TODO(synk): for deployment-size images add H-row tiling (1-row halo) and,
    # for large N, a per-grid-step batch block to amortize step overhead.
    N, H, W, Cin = x.shape
    C = params["head_w"].shape[-1]
    assert params["body_tail_w"].shape[-1] == C
    r = scale
    HW = H * W
    f32 = jnp.float32
    n_resblocks = len(params["body"])

    # Input -> channels-major (C, H*W); input channels zero-padded to C so every
    # conv has the same im2col width K = 9*C (+1 bias column).
    x_cm = jnp.transpose(x.astype(f32), (0, 3, 1, 2)).reshape(N, Cin, HW)
    x_cm = jnp.pad(x_cm, ((0, 0), (0, C - Cin), (0, 0)))
    msub = jnp.pad(data_mean.astype(f32), (0, C - Cin)).reshape(C, 1)

    # Pack every conv weight (+ bias as last column) into ONE lane-dense matrix.
    def pack(w, b):
        kh, kw, ci, co = w.shape
        wm = jnp.transpose(w.astype(f32).reshape(kh * kw * ci, co))  # (co, 9*ci)
        return jnp.concatenate([wm, b.astype(f32).reshape(co, 1)], axis=1)

    head_w = jnp.pad(params["head_w"].astype(f32),
                     ((0, 0), (0, 0), (0, C - Cin), (0, 0)))

    # Permute up-conv output channels to sub-pixel-group-major order
    # (PixelShuffle channel index is c*r*r + i*r + j) via reshape/transpose.
    up_w = params["up_w"].astype(f32).reshape(3, 3, C, C, r * r)
    up_w = jnp.transpose(up_w, (0, 1, 2, 4, 3)).reshape(3, 3, C, r * r * C)
    up_b = jnp.transpose(params["up_b"].astype(f32).reshape(C, r * r)).reshape(-1)

    # add_mean (std == 1) is fused into the tail conv's bias column.
    tail_b = params["tail_b"].astype(f32) + data_mean.astype(f32)

    blocks = [pack(head_w, params["head_b"])]
    for blk in params["body"]:
        blocks.append(pack(blk["w1"], blk["b1"]))
        blocks.append(pack(blk["w2"], blk["b2"]))
    blocks.append(pack(params["body_tail_w"], params["body_tail_b"]))
    blocks.append(pack(up_w, up_b))
    blocks.append(pack(params["tail_w"], tail_b))
    wmat = jnp.concatenate(blocks, axis=0)              # (R, 9*C + 1)

    o_head = 0
    o_body = C
    o_bt = o_body + 2 * n_resblocks * C
    o_up = o_bt + C
    o_tail = o_up + r * r * C
    R = o_tail + Cin
    assert wmat.shape == (R, 9 * C + 1)

    kern = _make_edsr_kernel(H, W, C, Cin, n_resblocks, float(res_scale), r,
                             (o_head, o_body, o_bt, o_up, o_tail))

    out = pl.pallas_call(
        kern,
        out_shape=jax.ShapeDtypeStruct((N, r * r * Cin, HW), jnp.float32),
        grid=(N,),
        in_specs=[
            pl.BlockSpec((1, C, HW), lambda n: (n, 0, 0)),
            pl.BlockSpec((C, 1), lambda n: (0, 0)),
            pl.BlockSpec((R, 9 * C + 1), lambda n: (0, 0)),
        ],
        out_specs=pl.BlockSpec((1, r * r * Cin, HW), lambda n: (n, 0, 0)),
        compiler_params=pltpu.CompilerParams(
            dimension_semantics=("parallel",),   # N=2 => both v7x TCs busy
            vmem_limit_bytes=32 * 1024 * 1024,
        ),
    )(x_cm, msub, wmat)

    # (N, r*r*Cin, H*W) -> (N, H*r, W*r, Cin): row index is (i*r+j)*Cin + c,
    # column index is h*W + w.
    out = out.reshape(N, r, r, Cin, H, W)
    out = jnp.transpose(out, (0, 4, 1, 5, 2, 3)).reshape(N, H * r, W * r, Cin)
    return out.astype(x.dtype)


# ----------------------------------------------------------------------------
# Parameter init (deterministic, synthetic — no checkpoint loading)
# ----------------------------------------------------------------------------
def _conv_params(key, kh, kw, cin, cout):
    kw_, kb_ = jax.random.split(key)
    fan_in = kh * kw * cin
    w = jax.random.normal(kw_, (kh, kw, cin, cout), jnp.float32) / jnp.sqrt(fan_in)
    b = 0.01 * jax.random.normal(kb_, (cout,), jnp.float32)
    return w, b


def init_edsr_params(key, in_channels, n_feats, tail_feats, n_resblocks, scale):
    assert scale == 2
    keys = list(jax.random.split(key, 4 + 2 * n_resblocks))
    p = {}
    p["head_w"], p["head_b"] = _conv_params(keys.pop(), 3, 3, in_channels, n_feats)
    body = []
    for _ in range(n_resblocks):
        w1, b1 = _conv_params(keys.pop(), 3, 3, n_feats, n_feats)
        w2, b2 = _conv_params(keys.pop(), 3, 3, n_feats, n_feats)
        body.append({"w1": w1, "b1": b1, "w2": w2, "b2": b2})
    p["body"] = body
    p["body_tail_w"], p["body_tail_b"] = _conv_params(keys.pop(), 3, 3, n_feats, tail_feats)
    p["up_w"], p["up_b"] = _conv_params(keys.pop(), 3, 3, tail_feats,
                                        (scale ** 2) * tail_feats)
    p["tail_w"], p["tail_b"] = _conv_params(keys.pop(), 3, 3, tail_feats, in_channels)
    return p


# ----------------------------------------------------------------------------
# Pure-JAX reference (for correctness checking of the fused kernel)
# ----------------------------------------------------------------------------
def _ref_conv(x, w, b):
    y = jax.lax.conv_general_dilated(
        x, w, window_strides=(1, 1), padding="SAME",
        dimension_numbers=("NHWC", "HWIO", "NHWC"),
        precision=jax.lax.Precision.HIGHEST)
    return y + b.reshape(1, 1, 1, -1)


def _ref_pixel_shuffle(x, r):
    N, H, W, Crr = x.shape
    C = Crr // (r * r)
    x = x.reshape(N, H, W, C, r, r)
    x = jnp.transpose(x, (0, 1, 4, 2, 5, 3))
    return x.reshape(N, H * r, W * r, C)


def edsr_reference(x, params, data_mean, *, res_scale=0.1, scale=2):
    m = data_mean.reshape(1, 1, 1, -1)
    h = x - m
    h = _ref_conv(h, params["head_w"], params["head_b"])
    res = h
    for blk in params["body"]:
        t = jax.nn.relu(_ref_conv(res, blk["w1"], blk["b1"]))
        t = _ref_conv(t, blk["w2"], blk["b2"])
        res = res + res_scale * t
    res = _ref_conv(res, params["body_tail_w"], params["body_tail_b"]) + h
    t = _ref_conv(res, params["up_w"], params["up_b"])
    t = _ref_pixel_shuffle(t, scale)
    t = _ref_conv(t, params["tail_w"], params["tail_b"])
    return jax.nn.relu(t + m)


# ----------------------------------------------------------------------------
if __name__ == "__main__":
    N, H, W = 2, 16, 16
    in_channels, n_feats, tail_feats = 3, 8, 8
    n_resblocks, scale, res_scale = 2, 2, 0.1

    root = jax.random.PRNGKey(0)
    kx, kp = jax.random.split(root)

    # synthetic stand-in for pirm_stats.npz data_mean (std is all-ones)
    data_mean = jnp.array([0.4488, 0.4371, 0.4040], dtype=jnp.float32)

    params = init_edsr_params(kp, in_channels, n_feats, tail_feats, n_resblocks, scale)

    # NHWC input (PyTorch equivalent NCHW shape: (2, 3, 16, 16))
    x = jax.random.uniform(kx, (N, H, W, in_channels), dtype=jnp.float32)

    fwd = jax.jit(lambda xx, pp, mm: edsr_forward(xx, pp, mm,
                                                  res_scale=res_scale, scale=scale))
    out = jax.block_until_ready(fwd(x, params, data_mean))

    assert out.shape == (N, H * scale, W * scale, in_channels), out.shape
    assert bool(jnp.all(out >= 0.0))          # final ReLU
    assert bool(jnp.all(jnp.isfinite(out)))

    ref = edsr_reference(x, params, data_mean, res_scale=res_scale, scale=scale)
    # 3e-2 tolerance covers the MXU's default (bf16-pass) f32 matmul precision
    # vs. the Precision.HIGHEST reference.
    err = float(jnp.max(jnp.abs(out - ref)))
    assert err < 3e-2, f"max |pallas - reference| = {err}"

    print("KERNEL_OK")
</pallas_src>

<mosaic_0001>
module attributes {stable_mosaic.version = 11 : i64} {
  func.func @kernel(%arg0: i32, %arg1: memref<1x8x256xf32, #tpu.memory_space<vmem>>, %arg2: memref<8x1xf32, #tpu.memory_space<vmem>>, %arg3: memref<83x73xf32, #tpu.memory_space<vmem>>, %arg4: memref<1x12x256xf32, #tpu.memory_space<vmem>>) attributes {dimension_semantics = [#tpu.dimension_semantics<parallel>], iteration_bounds = array<i64: 2>, scalar_prefetch = 0 : i64, scratch_operands = 0 : i64, tpu.core_type = #tpu.core_type<tc>, window_params = [{transform_indices = @transform_0, window_bounds = array<i64: 1, 8, 256>}, {pipeline_mode = #tpu.pipeline_mode<synchronous>, transform_indices = @transform_1, window_bounds = array<i64: 8, 1>}, {pipeline_mode = #tpu.pipeline_mode<synchronous>, transform_indices = @transform_2, window_bounds = array<i64: 83, 73>}, {transform_indices = @transform_3, window_bounds = array<i64: 1, 12, 256>}]} {
    %0 = tpu.iota {dimensions = array<i32: 1>} : vector<1x256xi32>
    %c16_i32 = arith.constant 16 : i32
    %c0_i32 = arith.constant 0 : i32
    %1 = arith.cmpi eq, %c16_i32, %c0_i32 : i32
    %c1_i32 = arith.constant 1 : i32
    %2 = arith.select %1, %c1_i32, %c16_i32 : i32
    %3 = vector.broadcast %2 : i32 to vector<1x256xi32>
    %4 = arith.remsi %0, %3 : vector<1x256xi32>
    %c0_i32_0 = arith.constant 0 : i32
    %5 = vector.broadcast %c0_i32_0 : i32 to vector<1x256xi32>
    %6 = arith.cmpi ne, %4, %5 : vector<1x256xi32>
    %c0_i32_1 = arith.constant 0 : i32
    %7 = vector.broadcast %c0_i32_1 : i32 to vector<1x256xi32>
    %8 = arith.cmpi slt, %4, %7 : vector<1x256xi32>
    %c0_i32_2 = arith.constant 0 : i32
    %9 = arith.cmpi slt, %2, %c0_i32_2 : i32
    %10 = vector.broadcast %9 : i1 to vector<1x256xi1>
    %11 = vector.broadcast %10 : vector<1x256xi1> to vector<1x256xi1>
    %12 = arith.xori %8, %11 : vector<1x256xi1>
    %13 = arith.andi %12, %6 : vector<1x256xi1>
    %14 = vector.broadcast %2 : i32 to vector<1x256xi32>
    %15 = arith.addi %4, %14 : vector<1x256xi32>
    %16 = arith.select %13, %15, %4 : vector<1x256xi1>, vector<1x256xi32>
    %c1_i32_3 = arith.constant 1 : i32
    %17 = vector.broadcast %c1_i32_3 : i32 to vector<1x256xi32>
    %18 = arith.cmpi sge, %16, %17 : vector<1x256xi32>
    %19 = arith.extui %18 : vector<1x256xi1> to vector<1x256xi32>
    %20 = arith.sitofp %19 : vector<1x256xi32> to vector<1x256xf32>
    %c14_i32 = arith.constant 14 : i32
    %21 = vector.broadcast %c14_i32 : i32 to vector<1x256xi32>
    %22 = arith.cmpi sle, %16, %21 : vector<1x256xi32>
    %23 = arith.extui %22 : vector<1x256xi1> to vector<1x256xi32>
    %24 = arith.sitofp %23 : vector<1x256xi32> to vector<1x256xf32>
    %cst = arith.constant 1.000000e+00 : f32
    %25 = vector.broadcast %cst : f32 to vector<1x256xf32>
    %c0 = arith.constant 0 : index
    %c0_4 = arith.constant 0 : index
    %c0_5 = arith.constant 0 : index
    %26 = vector.load %arg1[%c0, %c0_4, %c0_5] : memref<1x8x256xf32, #tpu.memory_space<vmem>>, vector<1x8x256xf32>
    %27 = vector.shape_cast %26 : vector<1x8x256xf32> to vector<8x256xf32>
    %c0_6 = arith.constant 0 : index
    %c0_7 = arith.constant 0 : index
    %28 = vector.load %arg2[%c0_6, %c0_7] : memref<8x1xf32, #tpu.memory_space<vmem>>, vector<8x1xf32>
    %29 = vector.broadcast %28 : vector<8x1xf32> to vector<8x256xf32>
    %30 = arith.subf %27, %29 : vector<8x256xf32>
    %c0_8 = arith.constant 0 : index
    %c0_9 = arith.constant 0 : index
    %31 = vector.load %arg3[%c0_8, %c0_9] : memref<83x73xf32, #tpu.memory_space<vmem>>, vector<8x73xf32>
    %cst_10 = arith.constant 0.000000e+00 : f32
    %32 = vector.broadcast %cst_10 : f32 to vector<8x17xf32>
    %33 = tpu.concatenate %32, %30, %32 in 1 : vector<8x17xf32>, vector<8x256xf32>, vector<8x17xf32> -> vector<8x290xf32>
    %34 = vector.extract_strided_slice %33 {offsets = [0, 0], sizes = [8, 256], strides = [1, 1]} : vector<8x290xf32> to vector<8x256xf32>
    %35 = vector.broadcast %20 : vector<1x256xf32> to vector<8x256xf32>
    %36 = arith.mulf %34, %35 : vector<8x256xf32>
    %37 = vector.extract_strided_slice %33 {offsets = [0, 1], sizes = [8, 256], strides = [1, 1]} : vector<8x290xf32> to vector<8x256xf32>
    %38 = vector.extract_strided_slice %33 {offsets = [0, 2], sizes = [8, 256], strides = [1, 1]} : vector<8x290xf32> to vector<8x256xf32>
    %39 = vector.broadcast %24 : vector<1x256xf32> to vector<8x256xf32>
    %40 = arith.mulf %38, %39 : vector<8x256xf32>
    %41 = vector.extract_strided_slice %33 {offsets = [0, 16], sizes = [8, 256], strides = [1, 1]} : vector<8x290xf32> to vector<8x256xf32>
    %42 = vector.broadcast %20 : vector<1x256xf32> to vector<8x256xf32>
    %43 = arith.mulf %41, %42 : vector<8x256xf32>
    %44 = vector.extract_strided_slice %33 {offsets = [0, 17], sizes = [8, 256], strides = [1, 1]} : vector<8x290xf32> to vector<8x256xf32>
    %45 = vector.extract_strided_slice %33 {offsets = [0, 18], sizes = [8, 256], strides = [1, 1]} : vector<8x290xf32> to vector<8x256xf32>
    %46 = vector.broadcast %24 : vector<1x256xf32> to vector<8x256xf32>
    %47 = arith.mulf %45, %46 : vector<8x256xf32>
    %48 = vector.extract_strided_slice %33 {offsets = [0, 32], sizes = [8, 256], strides = [1, 1]} : vector<8x290xf32> to vector<8x256xf32>
    %49 = vector.broadcast %20 : vector<1x256xf32> to vector<8x256xf32>
    %50 = arith.mulf %48, %49 : vector<8x256xf32>
    %51 = vector.extract_strided_slice %33 {offsets = [0, 33], sizes = [8, 256], strides = [1, 1]} : vector<8x290xf32> to vector<8x256xf32>
    %52 = vector.extract_strided_slice %33 {offsets = [0, 34], sizes = [8, 256], strides = [1, 1]} : vector<8x290xf32> to vector<8x256xf32>
    %53 = vector.broadcast %24 : vector<1x256xf32> to vector<8x256xf32>
    %54 = arith.mulf %52, %53 : vector<8x256xf32>
    %55 = tpu.concatenate %36, %37, %40, %43, %44, %47, %50, %51, %54, %25 in 0 : vector<8x256xf32>, vector<8x256xf32>, vector<8x256xf32>, vector<8x256xf32>, vector<8x256xf32>, vector<8x256xf32>, vector<8x256xf32>, vector<8x256xf32>, vector<8x256xf32>, vector<1x256xf32> -> vector<73x256xf32>
    %cst_11 = arith.constant dense<0.000000e+00> : vector<8x256xf32>
    %56 = tpu.matmul %31, %55, %cst_11 {dimension_numbers = #tpu.dot_dimension_numbers<[1], [0], [0], [1], [0, 0, 1, 1], [], []>} : vector<8x73xf32>, vector<73x256xf32>, vector<8x256xf32> -> vector<8x256xf32>
    %c8 = arith.constant 8 : index
    %c0_12 = arith.constant 0 : index
    %57 = vector.load %arg3[%c8, %c0_12] : memref<83x73xf32, #tpu.memory_space<vmem>>, vector<8x73xf32>
    %cst_13 = arith.constant 0.000000e+00 : f32
    %58 = vector.broadcast %cst_13 : f32 to vector<8x17xf32>
    %59 = tpu.concatenate %58, %56, %58 in 1 : vector<8x17xf32>, vector<8x256xf32>, vector<8x17xf32> -> vector<8x290xf32>
    %60 = vector.extract_strided_slice %59 {offsets = [0, 0], sizes = [8, 256], strides = [1, 1]} : vector<8x290xf32> to vector<8x256xf32>
    %61 = vector.broadcast %20 : vector<1x256xf32> to vector<8x256xf32>
    %62 = arith.mulf %60, %61 : vector<8x256xf32>
    %63 = vector.extract_strided_slice %59 {offsets = [0, 1], sizes = [8, 256], strides = [1, 1]} : vector<8x290xf32> to vector<8x256xf32>
    %64 = vector.extract_strided_slice %59 {offsets = [0, 2], sizes = [8, 256], strides = [1, 1]} : vector<8x290xf32> to vector<8x256xf32>
    %65 = vector.broadcast %24 : vector<1x256xf32> to vector<8x256xf32>
    %66 = arith.mulf %64, %65 : vector<8x256xf32>
    %67 = vector.extract_strided_slice %59 {offsets = [0, 16], sizes = [8, 256], strides = [1, 1]} : vector<8x290xf32> to vector<8x256xf32>
    %68 = vector.broadcast %20 : vector<1x256xf32> to vector<8x256xf32>
    %69 = arith.mulf %67, %68 : vector<8x256xf32>
    %70 = vector.extract_strided_slice %59 {offsets = [0, 17], sizes = [8, 256], strides = [1, 1]} : vector<8x290xf32> to vector<8x256xf32>
    %71 = vector.extract_strided_slice %59 {offsets = [0, 18], sizes = [8, 256], strides = [1, 1]} : vector<8x290xf32> to vector<8x256xf32>
    %72 = vector.broadcast %24 : vector<1x256xf32> to vector<8x256xf32>
    %73 = arith.mulf %71, %72 : vector<8x256xf32>
    %74 = vector.extract_strided_slice %59 {offsets = [0, 32], sizes = [8, 256], strides = [1, 1]} : vector<8x290xf32> to vector<8x256xf32>
    %75 = vector.broadcast %20 : vector<1x256xf32> to vector<8x256xf32>
    %76 = arith.mulf %74, %75 : vector<8x256xf32>
    %77 = vector.extract_strided_slice %59 {offsets = [0, 33], sizes = [8, 256], strides = [1, 1]} : vector<8x290xf32> to vector<8x256xf32>
    %78 = vector.extract_strided_slice %59 {offsets = [0, 34], sizes = [8, 256], strides = [1, 1]} : vector<8x290xf32> to vector<8x256xf32>
    %79 = vector.broadcast %24 : vector<1x256xf32> to vector<8x256xf32>
    %80 = arith.mulf %78, %79 : vector<8x256xf32>
    %81 = tpu.concatenate %62, %63, %66, %69, %70, %73, %76, %77, %80, %25 in 0 : vector<8x256xf32>, vector<8x256xf32>, vector<8x256xf32>, vector<8x256xf32>, vector<8x256xf32>, vector<8x256xf32>, vector<8x256xf32>, vector<8x256xf32>, vector<8x256xf32>, vector<1x256xf32> -> vector<73x256xf32>
    %cst_14 = arith.constant dense<0.000000e+00> : vector<8x256xf32>
    %82 = tpu.matmul %57, %81, %cst_14 {dimension_numbers = #tpu.dot_dimension_numbers<[1], [0], [0], [1], [0, 0, 1, 1], [], []>} : vector<8x73xf32>, vector<73x256xf32>, vector<8x256xf32> -> vector<8x256xf32>
    %cst_15 = arith.constant 0.000000e+00 : f32
    %83 = vector.broadcast %cst_15 : f32 to vector<8x256xf32>
    %84 = arith.maximumf %82, %83 : vector<8x256xf32>
    %c16 = arith.constant 16 : index
    %c0_16 = arith.constant 0 : index
    %85 = vector.load %arg3[%c16, %c0_16] : memref<83x73xf32, #tpu.memory_space<vmem>>, vector<8x73xf32>
    %cst_17 = arith.constant 0.000000e+00 : f32
    %86 = vector.broadcast %cst_17 : f32 to vector<8x17xf32>
    %87 = tpu.concatenate %86, %84, %86 in 1 : vector<8x17xf32>, vector<8x256xf32>, vector<8x17xf32> -> vector<8x290xf32>
    %88 = vector.extract_strided_slice %87 {offsets = [0, 0], sizes = [8, 256], strides = [1, 1]} : vector<8x290xf32> to vector<8x256xf32>
    %89 = vector.broadcast %20 : vector<1x256xf32> to vector<8x256xf32>
    %90 = arith.mulf %88, %89 : vector<8x256xf32>
    %91 = vector.extract_strided_slice %87 {offsets = [0, 1], sizes = [8, 256], strides = [1, 1]} : vector<8x290xf32> to vector<8x256xf32>
    %92 = vector.extract_strided_slice %87 {offsets = [0, 2], sizes = [8, 256], strides = [1, 1]} : vector<8x290xf32> to vector<8x256xf32>
    %93 = vector.broadcast %24 : vector<1x256xf32> to vector<8x256xf32>
    %94 = arith.mulf %92, %93 : vector<8x256xf32>
    %95 = vector.extract_strided_slice %87 {offsets = [0, 16], sizes = [8, 256], strides = [1, 1]} : vector<8x290xf32> to vector<8x256xf32>
    %96 = vector.broadcast %20 : vector<1x256xf32> to vector<8x256xf32>
    %97 = arith.mulf %95, %96 : vector<8x256xf32>
    %98 = vector.extract_strided_slice %87 {offsets = [0, 17], sizes = [8, 256], strides = [1, 1]} : vector<8x290xf32> to vector<8x256xf32>
    %99 = vector.extract_strided_slice %87 {offsets = [0, 18], sizes = [8, 256], strides = [1, 1]} : vector<8x290xf32> to vector<8x256xf32>
    %100 = vector.broadcast %24 : vector<1x256xf32> to vector<8x256xf32>
    %101 = arith.mulf %99, %100 : vector<8x256xf32>
    %102 = vector.extract_strided_slice %87 {offsets = [0, 32], sizes = [8, 256], strides = [1, 1]} : vector<8x290xf32> to vector<8x256xf32>
    %103 = vector.broadcast %20 : vector<1x256xf32> to vector<8x256xf32>
    %104 = arith.mulf %102, %103 : vector<8x256xf32>
    %105 = vector.extract_strided_slice %87 {offsets = [0, 33], sizes = [8, 256], strides = [1, 1]} : vector<8x290xf32> to vector<8x256xf32>
    %106 = vector.extract_strided_slice %87 {offsets = [0, 34], sizes = [8, 256], strides = [1, 1]} : vector<8x290xf32> to vector<8x256xf32>
    %107 = vector.broadcast %24 : vector<1x256xf32> to vector<8x256xf32>
    %108 = arith.mulf %106, %107 : vector<8x256xf32>
    %109 = tpu.concatenate %90, %91, %94, %97, %98, %101, %104, %105, %108, %25 in 0 : vector<8x256xf32>, vector<8x256xf32>, vector<8x256xf32>, vector<8x256xf32>, vector<8x256xf32>, vector<8x256xf32>, vector<8x256xf32>, vector<8x256xf32>, vector<8x256xf32>, vector<1x256xf32> -> vector<73x256xf32>
    %cst_18 = arith.constant dense<0.000000e+00> : vector<8x256xf32>
    %110 = tpu.matmul %85, %109, %cst_18 {dimension_numbers = #tpu.dot_dimension_numbers<[1], [0], [0], [1], [0, 0, 1, 1], [], []>} : vector<8x73xf32>, vector<73x256xf32>, vector<8x256xf32> -> vector<8x256xf32>
    %cst_19 = arith.constant 1.000000e-01 : f32
    %111 = vector.broadcast %cst_19 : f32 to vector<8x256xf32>
    %112 = arith.mulf %111, %110 : vector<8x256xf32>
    %113 = arith.addf %56, %112 : vector<8x256xf32>
    %c24 = arith.constant 24 : index
    %c0_20 = arith.constant 0 : index
    %114 = vector.load %arg3[%c24, %c0_20] : memref<83x73xf32, #tpu.memory_space<vmem>>, vector<8x73xf32>
    %cst_21 = arith.constant 0.000000e+00 : f32
    %115 = vector.broadcast %cst_21 : f32 to vector<8x17xf32>
    %116 = tpu.concatenate %115, %113, %115 in 1 : vector<8x17xf32>, vector<8x256xf32>, vector<8x17xf32> -> vector<8x290xf32>
    %117 = vector.extract_strided_slice %116 {offsets = [0, 0], sizes = [8, 256], strides = [1, 1]} : vector<8x290xf32> to vector<8x256xf32>
    %118 = vector.broadcast %20 : vector<1x256xf32> to vector<8x256xf32>
    %119 = arith.mulf %117, %118 : vector<8x256xf32>
    %120 = vector.extract_strided_slice %116 {offsets = [0, 1], sizes = [8, 256], strides = [1, 1]} : vector<8x290xf32> to vector<8x256xf32>
    %121 = vector.extract_strided_slice %116 {offsets = [0, 2], sizes = [8, 256], strides = [1, 1]} : vector<8x290xf32> to vector<8x256xf32>
    %122 = vector.broadcast %24 : vector<1x256xf32> to vector<8x256xf32>
    %123 = arith.mulf %121, %122 : vector<8x256xf32>
    %124 = vector.extract_strided_slice %116 {offsets = [0, 16], sizes = [8, 256], strides = [1, 1]} : vector<8x290xf32> to vector<8x256xf32>
    %125 = vector.broadcast %20 : vector<1x256xf32> to vector<8x256xf32>
    %126 = arith.mulf %124, %125 : vector<8x256xf32>
    %127 = vector.extract_strided_slice %116 {offsets = [0, 17], sizes = [8, 256], strides = [1, 1]} : vector<8x290xf32> to vector<8x256xf32>
    %128 = vector.extract_strided_slice %116 {offsets = [0, 18], sizes = [8, 256], strides = [1, 1]} : vector<8x290xf32> to vector<8x256xf32>
    %129 = vector.broadcast %24 : vector<1x256xf32> to vector<8x256xf32>
    %130 = arith.mulf %128, %129 : vector<8x256xf32>
    %131 = vector.extract_strided_slice %116 {offsets = [0, 32], sizes = [8, 256], strides = [1, 1]} : vector<8x290xf32> to vector<8x256xf32>
    %132 = vector.broadcast %20 : vector<1x256xf32> to vector<8x256xf32>
    %133 = arith.mulf %131, %132 : vector<8x256xf32>
    %134 = vector.extract_strided_slice %116 {offsets = [0, 33], sizes = [8, 256], strides = [1, 1]} : vector<8x290xf32> to vector<8x256xf32>
    %135 = vector.extract_strided_slice %116 {offsets = [0, 34], sizes = [8, 256], strides = [1, 1]} : vector<8x290xf32> to vector<8x256xf32>
    %136 = vector.broadcast %24 : vector<1x256xf32> to vector<8x256xf32>
    %137 = arith.mulf %135, %136 : vector<8x256xf32>
    %138 = tpu.concatenate %119, %120, %123, %126, %127, %130, %133, %134, %137, %25 in 0 : vector<8x256xf32>, vector<8x256xf32>, vector<8x256xf32>, vector<8x256xf32>, vector<8x256xf32>, vector<8x256xf32>, vector<8x256xf32>, vector<8x256xf32>, vector<8x256xf32>, vector<1x256xf32> -> vector<73x256xf32>
    %cst_22 = arith.constant dense<0.000000e+00> : vector<8x256xf32>
    %139 = tpu.matmul %114, %138, %cst_22 {dimension_numbers = #tpu.dot_dimension_numbers<[1], [0], [0], [1], [0, 0, 1, 1], [], []>} : vector<8x73xf32>, vector<73x256xf32>, vector<8x256xf32> -> vector<8x256xf32>
    %cst_23 = arith.constant 0.000000e+00 : f32
    %140 = vector.broadcast %cst_23 : f32 to vector<8x256xf32>
    %141 = arith.maximumf %139, %140 : vector<8x256xf32>
    %c32 = arith.constant 32 : index
    %c0_24 = arith.constant 0 : index
    %142 = vector.load %arg3[%c32, %c0_24] : memref<83x73xf32, #tpu.memory_space<vmem>>, vector<8x73xf32>
    %cst_25 = arith.constant 0.000000e+00 : f32
    %143 = vector.broadcast %cst_25 : f32 to vector<8x17xf32>
    %144 = tpu.concatenate %143, %141, %143 in 1 : vector<8x17xf32>, vector<8x256xf32>, vector<8x17xf32> -> vector<8x290xf32>
    %145 = vector.extract_strided_slice %144 {offsets = [0, 0], sizes = [8, 256], strides = [1, 1]} : vector<8x290xf32> to vector<8x256xf32>
    %146 = vector.broadcast %20 : vector<1x256xf32> to vector<8x256xf32>
    %147 = arith.mulf %145, %146 : vector<8x256xf32>
    %148 = vector.extract_strided_slice %144 {offsets = [0, 1], sizes = [8, 256], strides = [1, 1]} : vector<8x290xf32> to vector<8x256xf32>
    %149 = vector.extract_strided_slice %144 {offsets = [0, 2], sizes = [8, 256], strides = [1, 1]} : vector<8x290xf32> to vector<8x256xf32>
    %150 = vector.broadcast %24 : vector<1x256xf32> to vector<8x256xf32>
    %151 = arith.mulf %149, %150 : vector<8x256xf32>
    %152 = vector.extract_strided_slice %144 {offsets = [0, 16], sizes = [8, 256], strides = [1, 1]} : vector<8x290xf32> to vector<8x256xf32>
    %153 = vector.broadcast %20 : vector<1x256xf32> to vector<8x256xf32>
    %154 = arith.mulf %152, %153 : vector<8x256xf32>
    %155 = vector.extract_strided_slice %144 {offsets = [0, 17], sizes = [8, 256], strides = [1, 1]} : vector<8x290xf32> to vector<8x256xf32>
    %156 = vector.extract_strided_slice %144 {offsets = [0, 18], sizes = [8, 256], strides = [1, 1]} : vector<8x290xf32> to vector<8x256xf32>
    %157 = vector.broadcast %24 : vector<1x256xf32> to vector<8x256xf32>
    %158 = arith.mulf %156, %157 : vector<8x256xf32>
    %159 = vector.extract_strided_slice %144 {offsets = [0, 32], sizes = [8, 256], strides = [1, 1]} : vector<8x290xf32> to vector<8x256xf32>
    %160 = vector.broadcast %20 : vector<1x256xf32> to vector<8x256xf32>
    %161 = arith.mulf %159, %160 : vector<8x256xf32>
    %162 = vector.extract_strided_slice %144 {offsets = [0, 33], sizes = [8, 256], strides = [1, 1]} : vector<8x290xf32> to vector<8x256xf32>
    %163 = vector.extract_strided_slice %144 {offsets = [0, 34], sizes = [8, 256], strides = [1, 1]} : vector<8x290xf32> to vector<8x256xf32>
    %164 = vector.broadcast %24 : vector<1x256xf32> to vector<8x256xf32>
    %165 = arith.mulf %163, %164 : vector<8x256xf32>
    %166 = tpu.concatenate %147, %148, %151, %154, %155, %158, %161, %162, %165, %25 in 0 : vector<8x256xf32>, vector<8x256xf32>, vector<8x256xf32>, vector<8x256xf32>, vector<8x256xf32>, vector<8x256xf32>, vector<8x256xf32>, vector<8x256xf32>, vector<8x256xf32>, vector<1x256xf32> -> vector<73x256xf32>
    %cst_26 = arith.constant dense<0.000000e+00> : vector<8x256xf32>
    %167 = tpu.matmul %142, %166, %cst_26 {dimension_numbers = #tpu.dot_dimension_numbers<[1], [0], [0], [1], [0, 0, 1, 1], [], []>} : vector<8x73xf32>, vector<73x256xf32>, vector<8x256xf32> -> vector<8x256xf32>
    %cst_27 = arith.constant 1.000000e-01 : f32
    %168 = vector.broadcast %cst_27 : f32 to vector<8x256xf32>
    %169 = arith.mulf %168, %167 : vector<8x256xf32>
    %170 = arith.addf %113, %169 : vector<8x256xf32>
    %c40 = arith.constant 40 : index
    %c0_28 = arith.constant 0 : index
    %171 = vector.load %arg3[%c40, %c0_28] : memref<83x73xf32, #tpu.memory_space<vmem>>, vector<8x73xf32>
    %cst_29 = arith.constant 0.000000e+00 : f32
    %172 = vector.broadcast %cst_29 : f32 to vector<8x17xf32>
    %173 = tpu.concatenate %172, %170, %172 in 1 : vector<8x17xf32>, vector<8x256xf32>, vector<8x17xf32> -> vector<8x290xf32>
    %174 = vector.extract_strided_slice %173 {offsets = [0, 0], sizes = [8, 256], strides = [1, 1]} : vector<8x290xf32> to vector<8x256xf32>
    %175 = vector.broadcast %20 : vector<1x256xf32> to vector<8x256xf32>
    %176 = arith.mulf %174, %175 : vector<8x256xf32>
    %177 = vector.extract_strided_slice %173 {offsets = [0, 1], sizes = [8, 256], strides = [1, 1]} : vector<8x290xf32> to vector<8x256xf32>
    %178 = vector.extract_strided_slice %173 {offsets = [0, 2], sizes = [8, 256], strides = [1, 1]} : vector<8x290xf32> to vector<8x256xf32>
    %179 = vector.broadcast %24 : vector<1x256xf32> to vector<8x256xf32>
    %180 = arith.mulf %178, %179 : vector<8x256xf32>
    %181 = vector.extract_strided_slice %173 {offsets = [0, 16], sizes = [8, 256], strides = [1, 1]} : vector<8x290xf32> to vector<8x256xf32>
    %182 = vector.broadcast %20 : vector<1x256xf32> to vector<8x256xf32>
    %183 = arith.mulf %181, %182 : vector<8x256xf32>
    %184 = vector.extract_strided_slice %173 {offsets = [0, 17], sizes = [8, 256], strides = [1, 1]} : vector<8x290xf32> to vector<8x256xf32>
    %185 = vector.extract_strided_slice %173 {offsets = [0, 18], sizes = [8, 256], strides = [1, 1]} : vector<8x290xf32> to vector<8x256xf32>
    %186 = vector.broadcast %24 : vector<1x256xf32> to vector<8x256xf32>
    %187 = arith.mulf %185, %186 : vector<8x256xf32>
    %188 = vector.extract_strided_slice %173 {offsets = [0, 32], sizes = [8, 256], strides = [1, 1]} : vector<8x290xf32> to vector<8x256xf32>
    %189 = vector.broadcast %20 : vector<1x256xf32> to vector<8x256xf32>
    %190 = arith.mulf %188, %189 : vector<8x256xf32>
    %191 = vector.extract_strided_slice %173 {offsets = [0, 33], sizes = [8, 256], strides = [1, 1]} : vector<8x290xf32> to vector<8x256xf32>
    %192 = vector.extract_strided_slice %173 {offsets = [0, 34], sizes = [8, 256], strides = [1, 1]} : vector<8x290xf32> to vector<8x256xf32>
    %193 = vector.broadcast %24 : vector<1x256xf32> to vector<8x256xf32>
    %194 = arith.mulf %192, %193 : vector<8x256xf32>
    %195 = tpu.concatenate %176, %177, %180, %183, %184, %187, %190, %191, %194, %25 in 0 : vector<8x256xf32>, vector<8x256xf32>, vector<8x256xf32>, vector<8x256xf32>, vector<8x256xf32>, vector<8x256xf32>, vector<8x256xf32>, vector<8x256xf32>, vector<8x256xf32>, vector<1x256xf32> -> vector<73x256xf32>
    %cst_30 = arith.constant dense<0.000000e+00> : vector<8x256xf32>
    %196 = tpu.matmul %171, %195, %cst_30 {dimension_numbers = #tpu.dot_dimension_numbers<[1], [0], [0], [1], [0, 0, 1, 1], [], []>} : vector<8x73xf32>, vector<73x256xf32>, vector<8x256xf32> -> vector<8x256xf32>
    %197 = arith.addf %196, %56 : vector<8x256xf32>
    %c48 = arith.constant 48 : index
    %c0_31 = arith.constant 0 : index
    %198 = vector.load %arg3[%c48, %c0_31] : memref<83x73xf32, #tpu.memory_space<vmem>>, vector<32x73xf32>
    %cst_32 = arith.constant 0.000000e+00 : f32
    %199 = vector.broadcast %cst_32 : f32 to vector<8x17xf32>
    %200 = tpu.concatenate %199, %197, %199 in 1 : vector<8x17xf32>, vector<8x256xf32>, vector<8x17xf32> -> vector<8x290xf32>
    %201 = vector.extract_strided_slice %200 {offsets = [0, 0], sizes = [8, 256], strides = [1, 1]} : vector<8x290xf32> to vector<8x256xf32>
    %202 = vector.broadcast %20 : vector<1x256xf32> to vector<8x256xf32>
    %203 = arith.mulf %201, %202 : vector<8x256xf32>
    %204 = vector.extract_strided_slice %200 {offsets = [0, 1], sizes = [8, 256], strides = [1, 1]} : vector<8x290xf32> to vector<8x256xf32>
    %205 = vector.extract_strided_slice %200 {offsets = [0, 2], sizes = [8, 256], strides = [1, 1]} : vector<8x290xf32> to vector<8x256xf32>
    %206 = vector.broadcast %24 : vector<1x256xf32> to vector<8x256xf32>
    %207 = arith.mulf %205, %206 : vector<8x256xf32>
    %208 = vector.extract_strided_slice %200 {offsets = [0, 16], sizes = [8, 256], strides = [1, 1]} : vector<8x290xf32> to vector<8x256xf32>
    %209 = vector.broadcast %20 : vector<1x256xf32> to vector<8x256xf32>
    %210 = arith.mulf %208, %209 : vector<8x256xf32>
    %211 = vector.extract_strided_slice %200 {offsets = [0, 17], sizes = [8, 256], strides = [1, 1]} : vector<8x290xf32> to vector<8x256xf32>
    %212 = vector.extract_strided_slice %200 {offsets = [0, 18], sizes = [8, 256], strides = [1, 1]} : vector<8x290xf32> to vector<8x256xf32>
    %213 = vector.broadcast %24 : vector<1x256xf32> to vector<8x256xf32>
    %214 = arith.mulf %212, %213 : vector<8x256xf32>
    %215 = vector.extract_strided_slice %200 {offsets = [0, 32], sizes = [8, 256], strides = [1, 1]} : vector<8x290xf32> to vector<8x256xf32>
    %216 = vector.broadcast %20 : vector<1x256xf32> to vector<8x256xf32>
    %217 = arith.mulf %215, %216 : vector<8x256xf32>
    %218 = vector.extract_strided_slice %200 {offsets = [0, 33], sizes = [8, 256], strides = [1, 1]} : vector<8x290xf32> to vector<8x256xf32>
    %219 = vector.extract_strided_slice %200 {offsets = [0, 34], sizes = [8, 256], strides = [1, 1]} : vector<8x290xf32> to vector<8x256xf32>
    %220 = vector.broadcast %24 : vector<1x256xf32> to vector<8x256xf32>
    %221 = arith.mulf %219, %220 : vector<8x256xf32>
    %222 = tpu.concatenate %203, %204, %207, %210, %211, %214, %217, %218, %221, %25 in 0 : vector<8x256xf32>, vector<8x256xf32>, vector<8x256xf32>, vector<8x256xf32>, vector<8x256xf32>, vector<8x256xf32>, vector<8x256xf32>, vector<8x256xf32>, vector<8x256xf32>, vector<1x256xf32> -> vector<73x256xf32>
    %cst_33 = arith.constant dense<0.000000e+00> : vector<32x256xf32>
    %223 = tpu.matmul %198, %222, %cst_33 {dimension_numbers = #tpu.dot_dimension_numbers<[1], [0], [0], [1], [0, 0, 1, 1], [], []>} : vector<32x73xf32>, vector<73x256xf32>, vector<32x256xf32> -> vector<32x256xf32>
    %c80 = arith.constant 80 : index
    %c0_34 = arith.constant 0 : index
    %224 = vector.load %arg3[%c80, %c0_34] : memref<83x73xf32, #tpu.memory_space<vmem>>, vector<3x73xf32>
    %225 = vector.extract_strided_slice %223 {offsets = [0, 0], sizes = [8, 256], strides = [1, 1]} : vector<32x256xf32> to vector<8x256xf32>
    %cst_35 = arith.constant 0.000000e+00 : f32
    %226 = vector.broadcast %cst_35 : f32 to vector<8x17xf32>
    %227 = tpu.concatenate %226, %225, %226 in 1 : vector<8x17xf32>, vector<8x256xf32>, vector<8x17xf32> -> vector<8x290xf32>
    %228 = vector.extract_strided_slice %223 {offsets = [8, 0], sizes = [8, 256], strides = [1, 1]} : vector<32x256xf32> to vector<8x256xf32>
    %cst_36 = arith.constant 0.000000e+00 : f32
    %229 = vector.broadcast %cst_36 : f32 to vector<8x17xf32>
    %230 = tpu.concatenate %229, %228, %229 in 1 : vector<8x17xf32>, vector<8x256xf32>, vector<8x17xf32> -> vector<8x290xf32>
    %231 = vector.extract_strided_slice %223 {offsets = [16, 0], sizes = [8, 256], strides = [1, 1]} : vector<32x256xf32> to vector<8x256xf32>
    %cst_37 = arith.constant 0.000000e+00 : f32
    %232 = vector.broadcast %cst_37 : f32 to vector<8x17xf32>
    %233 = tpu.concatenate %232, %231, %232 in 1 : vector<8x17xf32>, vector<8x256xf32>, vector<8x17xf32> -> vector<8x290xf32>
    %234 = vector.extract_strided_slice %223 {offsets = [24, 0], sizes = [8, 256], strides = [1, 1]} : vector<32x256xf32> to vector<8x256xf32>
    %cst_38 = arith.constant 0.000000e+00 : f32
    %235 = vector.broadcast %cst_38 : f32 to vector<8x17xf32>
    %236 = tpu.concatenate %235, %234, %235 in 1 : vector<8x17xf32>, vector<8x256xf32>, vector<8x17xf32> -> vector<8x290xf32>
    %237 = vector.extract_strided_slice %236 {offsets = [0, 0], sizes = [8, 256], strides = [1, 1]} : vector<8x290xf32> to vector<8x256xf32>
    %238 = vector.broadcast %20 : vector<1x256xf32> to vector<8x256xf32>
    %239 = arith.mulf %237, %238 : vector<8x256xf32>
    %240 = vector.extract_strided_slice %233 {offsets = [0, 1], sizes = [8, 256], strides = [1, 1]} : vector<8x290xf32> to vector<8x256xf32>
    %241 = vector.extract_strided_slice %236 {offsets = [0, 1], sizes = [8, 256], strides = [1, 1]} : vector<8x290xf32> to vector<8x256xf32>
    %242 = vector.extract_strided_slice %230 {offsets = [0, 16], sizes = [8, 256], strides = [1, 1]} : vector<8x290xf32> to vector<8x256xf32>
    %243 = vector.broadcast %20 : vector<1x256xf32> to vector<8x256xf32>
    %244 = arith.mulf %242, %243 : vector<8x256xf32>
    %245 = vector.extract_strided_slice %227 {offsets = [0, 17], sizes = [8, 256], strides = [1, 1]} : vector<8x290xf32> to vector<8x256xf32>
    %246 = vector.extract_strided_slice %230 {offsets = [0, 17], sizes = [8, 256], strides = [1, 1]} : vector<8x290xf32> to vector<8x256xf32>
    %247 = vector.extract_strided_slice %236 {offsets = [0, 16], sizes = [8, 256], strides = [1, 1]} : vector<8x290xf32> to vector<8x256xf32>
    %248 = vector.broadcast %20 : vector<1x256xf32> to vector<8x256xf32>
    %249 = arith.mulf %247, %248 : vector<8x256xf32>
    %250 = vector.extract_strided_slice %233 {offsets = [0, 17], sizes = [8, 256], strides = [1, 1]} : vector<8x290xf32> to vector<8x256xf32>
    %251 = vector.extract_strided_slice %236 {offsets = [0, 17], sizes = [8, 256], strides = [1, 1]} : vector<8x290xf32> to vector<8x256xf32>
    %252 = tpu.concatenate %239, %240, %241, %244, %245, %246, %249, %250, %251, %25 in 0 : vector<8x256xf32>, vector<8x256xf32>, vector<8x256xf32>, vector<8x256xf32>, vector<8x256xf32>, vector<8x256xf32>, vector<8x256xf32>, vector<8x256xf32>, vector<8x256xf32>, vector<1x256xf32> -> vector<73x256xf32>
    %cst_39 = arith.constant dense<0.000000e+00> : vector<3x256xf32>
    %253 = tpu.matmul %224, %252, %cst_39 {dimension_numbers = #tpu.dot_dimension_numbers<[1], [0], [0], [1], [0, 0, 1, 1], [], []>} : vector<3x73xf32>, vector<73x256xf32>, vector<3x256xf32> -> vector<3x256xf32>
    %cst_40 = arith.constant 0.000000e+00 : f32
    %254 = vector.broadcast %cst_40 : f32 to vector<3x256xf32>
    %255 = arith.maximumf %253, %254 : vector<3x256xf32>
    %256 = vector.extract_strided_slice %233 {offsets = [0, 1], sizes = [8, 256], strides = [1, 1]} : vector<8x290xf32> to vector<8x256xf32>
    %257 = vector.extract_strided_slice %236 {offsets = [0, 1], sizes = [8, 256], strides = [1, 1]} : vector<8x290xf32> to vector<8x256xf32>
    %258 = vector.extract_strided_slice %233 {offsets = [0, 2], sizes = [8, 256], strides = [1, 1]} : vector<8x290xf32> to vector<8x256xf32>
    %259 = vector.broadcast %24 : vector<1x256xf32> to vector<8x256xf32>
    %260 = arith.mulf %258, %259 : vector<8x256xf32>
    %261 = vector.extract_strided_slice %227 {offsets = [0, 17], sizes = [8, 256], strides = [1, 1]} : vector<8x290xf32> to vector<8x256xf32>
    %262 = vector.extract_strided_slice %230 {offsets = [0, 17], sizes = [8, 256], strides = [1, 1]} : vector<8x290xf32> to vector<8x256xf32>
    %263 = vector.extract_strided_slice %227 {offsets = [0, 18], sizes = [8, 256], strides = [1, 1]} : vector<8x290xf32> to vector<8x256xf32>
    %264 = vector.broadcast %24 : vector<1x256xf32> to vector<8x256xf32>
    %265 = arith.mulf %263, %264 : vector<8x256xf32>
    %266 = vector.extract_strided_slice %233 {offsets = [0, 17], sizes = [8, 256], strides = [1, 1]} : vector<8x290xf32> to vector<8x256xf32>
    %267 = vector.extract_strided_slice %236 {offsets = [0, 17], sizes = [8, 256], strides = [1, 1]} : vector<8x290xf32> to vector<8x256xf32>
    %268 = vector.extract_strided_slice %233 {offsets = [0, 18], sizes = [8, 256], strides = [1, 1]} : vector<8x290xf32> to vector<8x256xf32>
    %269 = vector.broadcast %24 : vector<1x256xf32> to vector<8x256xf32>
    %270 = arith.mulf %268, %269 : vector<8x256xf32>
    %271 = tpu.concatenate %256, %257, %260, %261, %262, %265, %266, %267, %270, %25 in 0 : vector<8x256xf32>, vector<8x256xf32>, vector<8x256xf32>, vector<8x256xf32>, vector<8x256xf32>, vector<8x256xf32>, vector<8x256xf32>, vector<8x256xf32>, vector<8x256xf32>, vector<1x256xf32> -> vector<73x256xf32>
    %cst_41 = arith.constant dense<0.000000e+00> : vector<3x256xf32>
    %272 = tpu.matmul %224, %271, %cst_41 {dimension_numbers = #tpu.dot_dimension_numbers<[1], [0], [0], [1], [0, 0, 1, 1], [], []>} : vector<3x73xf32>, vector<73x256xf32>, vector<3x256xf32> -> vector<3x256xf32>
    %cst_42 = arith.constant 0.000000e+00 : f32
    %273 = vector.broadcast %cst_42 : f32 to vector<3x256xf32>
    %274 = arith.maximumf %272, %273 : vector<3x256xf32>
    %275 = vector.extract_strided_slice %230 {offsets = [0, 16], sizes = [8, 256], strides = [1, 1]} : vector<8x290xf32> to vector<8x256xf32>
    %276 = vector.broadcast %20 : vector<1x256xf32> to vector<8x256xf32>
    %277 = arith.mulf %275, %276 : vector<8x256xf32>
    %278 = vector.extract_strided_slice %227 {offsets = [0, 17], sizes = [8, 256], strides = [1, 1]} : vector<8x290xf32> to vector<8x256xf32>
    %279 = vector.extract_strided_slice %230 {offsets = [0, 17], sizes = [8, 256], strides = [1, 1]} : vector<8x290xf32> to vector<8x256xf32>
    %280 = vector.extract_strided_slice %236 {offsets = [0, 16], sizes = [8, 256], strides = [1, 1]} : vector<8x290xf32> to vector<8x256xf32>
    %281 = vector.broadcast %20 : vector<1x256xf32> to vector<8x256xf32>
    %282 = arith.mulf %280, %281 : vector<8x256xf32>
    %283 = vector.extract_strided_slice %233 {offsets = [0, 17], sizes = [8, 256], strides = [1, 1]} : vector<8x290xf32> to vector<8x256xf32>
    %284 = vector.extract_strided_slice %236 {offsets = [0, 17], sizes = [8, 256], strides = [1, 1]} : vector<8x290xf32> to vector<8x256xf32>
    %285 = vector.extract_strided_slice %230 {offsets = [0, 32], sizes = [8, 256], strides = [1, 1]} : vector<8x290xf32> to vector<8x256xf32>
    %286 = vector.broadcast %20 : vector<1x256xf32> to vector<8x256xf32>
    %287 = arith.mulf %285, %286 : vector<8x256xf32>
    %288 = vector.extract_strided_slice %227 {offsets = [0, 33], sizes = [8, 256], strides = [1, 1]} : vector<8x290xf32> to vector<8x256xf32>
    %289 = vector.extract_strided_slice %230 {offsets = [0, 33], sizes = [8, 256], strides = [1, 1]} : vector<8x290xf32> to vector<8x256xf32>
    %290 = tpu.concatenate %277, %278, %279, %282, %283, %284, %287, %288, %289, %25 in 0 : vector<8x256xf32>, vector<8x256xf32>, vector<8x256xf32>, vector<8x256xf32>, vector<8x256xf32>, vector<8x256xf32>, vector<8x256xf32>, vector<8x256xf32>, vector<8x256xf32>, vector<1x256xf32> -> vector<73x256xf32>
    %cst_43 = arith.constant dense<0.000000e+00> : vector<3x256xf32>
    %291 = tpu.matmul %224, %290, %cst_43 {dimension_numbers = #tpu.dot_dimension_numbers<[1], [0], [0], [1], [0, 0, 1, 1], [], []>} : vector<3x73xf32>, vector<73x256xf32>, vector<3x256xf32> -> vector<3x256xf32>
    %cst_44 = arith.constant 0.000000e+00 : f32
    %292 = vector.broadcast %cst_44 : f32 to vector<3x256xf32>
    %293 = arith.maximumf %291, %292 : vector<3x256xf32>
    %294 = vector.extract_strided_slice %227 {offsets = [0, 17], sizes = [8, 256], strides = [1, 1]} : vector<8x290xf32> to vector<8x256xf32>
    %295 = vector.extract_strided_slice %230 {offsets = [0, 17], sizes = [8, 256], strides = [1, 1]} : vector<8x290xf32> to vector<8x256xf32>
    %296 = vector.extract_strided_slice %227 {offsets = [0, 18], sizes = [8, 256], strides = [1, 1]} : vector<8x290xf32> to vector<8x256xf32>
    %297 = vector.broadcast %24 : vector<1x256xf32> to vector<8x256xf32>
    %298 = arith.mulf %296, %297 : vector<8x256xf32>
    %299 = vector.extract_strided_slice %233 {offsets = [0, 17], sizes = [8, 256], strides = [1, 1]} : vector<8x290xf32> to vector<8x256xf32>
    %300 = vector.extract_strided_slice %236 {offsets = [0, 17], sizes = [8, 256], strides = [1, 1]} : vector<8x290xf32> to vector<8x256xf32>
    %301 = vector.extract_strided_slice %233 {offsets = [0, 18], sizes = [8, 256], strides = [1, 1]} : vector<8x290xf32> to vector<8x256xf32>
    %302 = vector.broadcast %24 : vector<1x256xf32> to vector<8x256xf32>
    %303 = arith.mulf %301, %302 : vector<8x256xf32>
    %304 = vector.extract_strided_slice %227 {offsets = [0, 33], sizes = [8, 256], strides = [1, 1]} : vector<8x290xf32> to vector<8x256xf32>
    %305 = vector.extract_strided_slice %230 {offsets = [0, 33], sizes = [8, 256], strides = [1, 1]} : vector<8x290xf32> to vector<8x256xf32>
    %306 = vector.extract_strided_slice %227 {offsets = [0, 34], sizes = [8, 256], strides = [1, 1]} : vector<8x290xf32> to vector<8x256xf32>
    %307 = vector.broadcast %24 : vector<1x256xf32> to vector<8x256xf32>
    %308 = arith.mulf %306, %307 : vector<8x256xf32>
    %309 = tpu.concatenate %294, %295, %298, %299, %300, %303, %304, %305, %308, %25 in 0 : vector<8x256xf32>, vector<8x256xf32>, vector<8x256xf32>, vector<8x256xf32>, vector<8x256xf32>, vector<8x256xf32>, vector<8x256xf32>, vector<8x256xf32>, vector<8x256xf32>, vector<1x256xf32> -> vector<73x256xf32>
    %cst_45 = arith.constant dense<0.000000e+00> : vector<3x256xf32>
    %310 = tpu.matmul %224, %309, %cst_45 {dimension_numbers = #tpu.dot_dimension_numbers<[1], [0], [0], [1], [0, 0, 1, 1], [], []>} : vector<3x73xf32>, vector<73x256xf32>, vector<3x256xf32> -> vector<3x256xf32>
    %cst_46 = arith.constant 0.000000e+00 : f32
    %311 = vector.broadcast %cst_46 : f32 to vector<3x256xf32>
    %312 = arith.maximumf %310, %311 : vector<3x256xf32>
    %313 = tpu.concatenate %255, %274, %293, %312 in 0 : vector<3x256xf32>, vector<3x256xf32>, vector<3x256xf32>, vector<3x256xf32> -> vector<12x256xf32>
    %c0_47 = arith.constant 0 : index
    %c0_48 = arith.constant 0 : index
    %c0_49 = arith.constant 0 : index
    %314 = vector.load %arg4[%c0_47, %c0_48, %c0_49] : memref<1x12x256xf32, #tpu.memory_space<vmem>>, vector<1x12x256xf32>
    %315 = vector.shape_cast %314 : vector<1x12x256xf32> to vector<12x256xf32>
    %316 = vector.shape_cast %313 : vector<12x256xf32> to vector<1x12x256xf32>
    tpu.vector_store %arg4[%c0_47, %c0_48, %c0_49], %316 {strides = array<i32>} : memref<1x12x256xf32, #tpu.memory_space<vmem>>, vector<1x12x256xf32>,
    return
  }
  func.func @transform_0(%arg0: i32) -> (i32, i32, i32) {
    %c0_i32 = arith.constant 0 : i32
    %c0_i32_0 = arith.constant 0 : i32
    %c0_i32_1 = arith.constant 0 : i32
    return %arg0, %c0_i32, %c0_i32_0 : i32, i32, i32
  }
  func.func @transform_1(%arg0: i32) -> (i32, i32) {
    %c0_i32 = arith.constant 0 : i32
    %c0_i32_0 = arith.constant 0 : i32
    %c0_i32_1 = arith.constant 0 : i32
    return %c0_i32, %c0_i32_0 : i32, i32
  }
  func.func @transform_2(%arg0: i32) -> (i32, i32) {
    %c0_i32 = arith.constant 0 : i32
    %c0_i32_0 = arith.constant 0 : i32
    %c0_i32_1 = arith.constant 0 : i32
    return %c0_i32, %c0_i32_0 : i32, i32
  }
  func.func @transform_3(%arg0: i32) -> (i32, i32, i32) {
    %c0_i32 = arith.constant 0 : i32
    %c0_i32_0 = arith.constant 0 : i32
    %c0_i32_1 = arith.constant 0 : i32
    return %arg0, %c0_i32, %c0_i32_0 : i32, i32, i32
  }
}

</mosaic_0001>

<llo_original>
// kernel: _lambda_.1
$region0: #{_lambda_.1}
  #allocation0 [shape = 'u32[]', space=smem, size = 0x4, offset = 0x4, fixed_abs, tag = 'smem constant byte address 0x4 - core index']
  #allocation1 [shape = 'u32[72,128]{1,0:T(1,128)}', space=vmem, size = 0x9000, scoped, tag = 'internal scratch']
  %s0 = inlined_call_operand.vmem [shape: f32[2,8,256], index: 0, kind: input, shape index: {}]
  %s1 = inlined_call_operand.vmem [shape: f32[8,1], index: 1, kind: input, shape index: {}]
  %s2 = inlined_call_operand.vmem [shape: f32[83,73], index: 2, kind: input, shape index: {}]
  %s3 = inlined_call_operand.vmem [shape: f32[2,12,256], index: 3, kind: output, shape index: {}]
  %s4 = sld [smem:[#allocation0]]
  $region45: #{_lambda_.1} parent=0
    _
  %s6 = ssub.s32 1, %s4
  %s7 = scalar_select 0, %s6, %s4
  loop: start=0, step=1, limit=4
  $region2: #{_lambda_.1} parent=0 // loop_pre_header
    _
  $region3: #{_lambda_.1} parent=0 // loop_header
    %s9 = sphi 0, %s13
    %p10 = scmp.ge.s32.totalorder %s9, 4
    %s19 = sphi 0, %s21
    %s22 = sphi 0, %s19
    %s23 = sphi 0, %s22
    %s39 = sphi 0, %s23
    %s43 = sphi 0, %s43
    %s45 = sphi 0, %s43
    %s46 = sphi 0, %s45
    %s60 = sphi 0, %s46
    %s64 = sphi 0, %s64
    %s66 = sphi 0, %s64
    %s67 = sphi 0, %s66
    %s81 = sphi 0, %s67
    %s87 = sphi 0, %s89
    %s90 = sphi 0, %s87
    %s91 = sphi 0, %s90
    %s107 = sphi 0, %s91
  $region4: #{_lambda_.1} parent=0 // loop_header_branch
    %12 = sbr.rel (%p10) target = $region8
  $region5: #{_lambda_.1} parent=0 // loop_body
    %s14 = ssub.s32 %s9, 1
    %s15 = ssub.s32 %s9, 2
    %s16 = sadd.s32 %s9, 1
    %s17 = ssub.s32 %s9, %s16
    %p18 = scmp.eq.s32.totalorder %s17, 0
    %s20 = sadd.s32 %s19, 1
    %s21 = scalar_select %p18, %s19, %s20
    %p24 = pneg %p18
    %p25 = scmp.eq.s32.totalorder %s9, 1
    %p26 = por %p24, %p25
    %p27 = scmp.ne.s32.totalorder %s19, %s22
    %p28 = scmp.eq.s32.totalorder %s9, 0
    %p29 = por %p27, %p28
    %p30 = scmp.ne.s32.totalorder %s19, %s22
    %p31 = scmp.eq.s32.totalorder %s14, 1
    %p32 = por %p30, %p31
    %p33 = scmp.ne.s32.totalorder %s22, %s23
    %p34 = scmp.eq.s32.totalorder %s14, 0
    %p35 = por %p33, %p34
    %p36 = scmp.ne.s32.totalorder %s22, %s23
    %p37 = scmp.eq.s32.totalorder %s15, 1
    %p38 = por %p36, %p37
    %p40 = scmp.ne.s32.totalorder %s23, %s39
    %p41 = scmp.eq.s32.totalorder %s15, 0
    %p42 = por %p40, %p41
    %s44 = sadd.s32 %s43, 1
    %p47 = scmp.eq.s32.totalorder %s9, 1
    %p48 = scmp.ne.s32.totalorder %s43, %s45
    %p49 = scmp.eq.s32.totalorder %s9, 0
    %p50 = por %p48, %p49
    %p51 = scmp.ne.s32.totalorder %s43, %s45
    %p52 = scmp.eq.s32.totalorder %s14, 1
    %p53 = por %p51, %p52
    %p54 = scmp.ne.s32.totalorder %s45, %s46
    %p55 = scmp.eq.s32.totalorder %s14, 0
    %p56 = por %p54, %p55
    %p57 = scmp.ne.s32.totalorder %s45, %s46
    %p58 = scmp.eq.s32.totalorder %s15, 1
    %p59 = por %p57, %p58
    %p61 = scmp.ne.s32.totalorder %s46, %s60
    %p62 = scmp.eq.s32.totalorder %s15, 0
    %p63 = por %p61, %p62
    %s65 = sadd.s32 %s64, 1
    %p68 = scmp.eq.s32.totalorder %s9, 1
    %p69 = scmp.ne.s32.totalorder %s64, %s66
    %p70 = scmp.eq.s32.totalorder %s9, 0
    %p71 = por %p69, %p70
    %p72 = scmp.ne.s32.totalorder %s64, %s66
    %p73 = scmp.eq.s32.totalorder %s14, 1
    %p74 = por %p72, %p73
    %p75 = scmp.ne.s32.totalorder %s66, %s67
    %p76 = scmp.eq.s32.totalorder %s14, 0
    %p77 = por %p75, %p76
    %p78 = scmp.ne.s32.totalorder %s66, %s67
    %p79 = scmp.eq.s32.totalorder %s15, 1
    %p80 = por %p78, %p79
    %p82 = scmp.ne.s32.totalorder %s67, %s81
    %p83 = scmp.eq.s32.totalorder %s15, 0
    %p84 = por %p82, %p83
    %s85 = ssub.s32 %s9, %s16
    %p86 = scmp.eq.s32.totalorder %s85, 0
    %s88 = sadd.s32 %s87, 1
    %s89 = scalar_select %p86, %s87, %s88
    %p92 = pneg %p86
    %p93 = scmp.eq.s32.totalorder %s9, 1
    %p94 = por %p92, %p93
    %p95 = scmp.ne.s32.totalorder %s87, %s90
    %p96 = scmp.eq.s32.totalorder %s9, 0
    %p97 = por %p95, %p96
    %p98 = scmp.ne.s32.totalorder %s87, %s90
    %p99 = scmp.eq.s32.totalorder %s14, 1
    %p100 = por %p98, %p99
    %p101 = scmp.ne.s32.totalorder %s90, %s91
    %p102 = scmp.eq.s32.totalorder %s14, 0
    %p103 = por %p101, %p102
    %p104 = scmp.ne.s32.totalorder %s90, %s91
    %p105 = scmp.eq.s32.totalorder %s15, 1
    %p106 = por %p104, %p105
    %p108 = scmp.ne.s32.totalorder %s91, %s107
    %p109 = scmp.eq.s32.totalorder %s15, 0
    %p110 = por %p108, %p109
    %p111 = scmp.le.s32.totalorder 1, %s9
    %p112 = scmp.lt.s32.totalorder %s9, 3
    %p113 = pnand %p111, %p112
    %p114 = pneg %p113
    // Predicated region
    $region9: #{_lambda_.1} parent=5 // pred_check
      _
    $region10: #{_lambda_.1} parent=5 // pred_check_branch
      %116 = sbr.rel (%p113) target = $region12
    $region11: #{_lambda_.1} parent=5 // pred_region
      %s117 = ssub.s32 %s9, 1
      // Predicated region
      $region13: #{_lambda_.1} parent=11 // pred_check
        %p118 = pneg %p56
      $region14: #{_lambda_.1} parent=11 // pred_check_branch
        %120 = sbr.rel (%p118) target = $region16
      $region15: #{_lambda_.1} parent=11 // pred_region
        _
      $region16: #{_lambda_.1} parent=11 // pred_fallthru
        _
      // Predicated region
      $region17: #{_lambda_.1} parent=11 // pred_check
        %p121 = pneg %p77
      $region18: #{_lambda_.1} parent=11 // pred_check_branch
        %123 = sbr.rel (%p121) target = $region20
      $region19: #{_lambda_.1} parent=11 // pred_region
        _
      $region20: #{_lambda_.1} parent=11 // pred_fallthru
        _
    $region12: #{_lambda_.1} parent=5 // pred_fallthru
      _
    %p124 = scmp.lt.s32.totalorder %s9, 2
    // Predicated region
    $region21: #{_lambda_.1} parent=5 // pred_check
      %p125 = pneg %p124
    $region22: #{_lambda_.1} parent=5 // pred_check_branch
      %127 = sbr.rel (%p125) target = $region24
    $region23: #{_lambda_.1} parent=5 // pred_region
      // Predicated region
      $region25: #{_lambda_.1} parent=23 // pred_check
        %p128 = pneg %p29
      $region26: #{_lambda_.1} parent=23 // pred_check_branch
        %130 = sbr.rel (%p128) target = $region28
      $region27: #{_lambda_.1} parent=23 // pred_region
        %p131 = scmp.lt.s32.totalorder %s9, 1
        %s132 = scalar_select %p131, %s9, 1
        %s133 = smul.addr %s132, 2
        %s134 = smul.addr %s133, 8
        %s135 = scalar_lea.vmem %s0, %s134
      $region28: #{_lambda_.1} parent=23 // pred_fallthru
        _
    $region24: #{_lambda_.1} parent=5 // pred_fallthru
      _
    %p136 = scmp.le.s32.totalorder 1, %s9
    %p137 = scmp.lt.s32.totalorder %s9, 3
    %p138 = pnand %p136, %p137
    %p139 = pneg %p138
    // Predicated region
    $region29: #{_lambda_.1} parent=5 // pred_check
      _
    $region30: #{_lambda_.1} parent=5 // pred_check_branch
      %141 = sbr.rel (%p138) target = $region32
    $region31: #{_lambda_.1} parent=5 // pred_region
      %s142 = ssub.s32 %s9, 1
      %p143 = scmp.lt.s32.totalorder %s14, 1
      %s144 = scalar_select %p143, %s14, 1
      %s145 = smul.addr %s144, 2
      %s146 = smul.addr %s145, 8
      %s147 = scalar_lea.vmem %s0, %s146
      %p148 = pneg %p35
      %p149 = pneg %p32
      %p150 = pneg %p56
      %p151 = pneg %p53
      %p152 = pneg %p77
      %p153 = pneg %p74
      %p154 = pneg %p103
      %p155 = pneg %p100
      %p156 = scmp.lt.s32.totalorder %s14, 1
      %s157 = scalar_select %p156, %s14, 1
      %s158 = smul.addr %s157, 4
      %s159 = smul.addr %s158, 8
      %s160 = scalar_lea.vmem %s3, %s159
      %p161 = scmp.lt.s32.totalorder %s14, 1
      %s162 = scalar_select %p161, %s14, 1
      %s163 = smul.addr %s162, 2
      %s164 = smul.addr %s163, 8
      %s165 = scalar_lea.vmem %s0, %s164
      %p166 = scmp.lt.s32.totalorder %s14, 1
      %s167 = scalar_select %p166, %s14, 1
      %s168 = smul.addr %s167, 4
      %s169 = smul.addr %s168, 8
      %s170 = scalar_lea.vmem %s3, %s169
      %v171 = vlaneseq
      %v172 = vand.u32 %v171, 127
      %v173 = vadd.s32 %v172, 128
      %vm174 = vcmp.lt.s32.totalorder %v172, 0
      %v175 = vsub.s32 0, %v172
      %v176 = vsel %vm174, %v175, %v172
      %v177 = vshrl.u32 %v176, 4
      %v178 = vand.u32 %v176, 15
      %v179 = vsub.s32 0, %v178
      %v180 = vsel %vm174, %v179, %v178
      %vm181 = vcmp.lt.s32.totalorder %v173, 0
      %v182 = vsub.s32 0, %v173
      %v183 = vsel %vm181, %v182, %v173
      %v184 = vshrl.u32 %v183, 4
      %v185 = vand.u32 %v183, 15
      %v186 = vsub.s32 0, %v185
      %v187 = vsel %vm181, %v186, %v185
      %vm188 = vcmp.ne.s32.totalorder %v180, 0
      %vm189 = vcmp.ne.s32.totalorder %v187, 0
      %vm190 = vcmp.lt.s32.totalorder %v180, 0
      %vm191 = vcmp.lt.s32.totalorder %v187, 0
      %vm192 = vmand %vm190, %vm188
      %vm193 = vmand %vm191, %vm189
      %v194 = vadd.s32 %v180, 16
      %v195 = vadd.s32 %v187, 16
      %v196 = vsel %vm192, %v194, %v180
      %v197 = vsel %vm193, %v195, %v187
      %vm198 = vcmp.ge.s32.totalorder %v196, 1
      %vm199 = vcmp.ge.s32.totalorder %v197, 1
      %v200 = vsel %vm198, 1, 0
      %v201 = vsel %vm199, 1, 0
      %v202 = vcvt.s32.f32 %v200
      %v203 = vcvt.s32.f32 %v201
      %vm204 = vcmp.le.s32.totalorder %v196, 14
      %vm205 = vcmp.le.s32.totalorder %v197, 14
      %v206 = vsel %vm204, 1, 0
      %v207 = vsel %vm205, 1, 0
      %v208 = vcvt.s32.f32 %v206
      %v209 = vcvt.s32.f32 %v207
      %v210 = vld [vmem:[%s165] sm:$0xff]
      %v211 = vld [vmem:[%s165 + $0x8] sm:$0xff]
      %v212 = vld [vmem:[%s1] sm:$0xff]
      %214 = vset.pattern.permute.xlu0 0
      %215 = vperm.xlu0 %214, %v212
      %v216 = vpop.permute.xlu0 %215
      %v218 = vsub.f32 %v210, %v216
      %v219 = vsub.f32 %v211, %v216
      %v220 = vld [vmem:[%s2] sm:$0xff]
      %223 = vrot.lane.b32.xlu0 %v218, 17
      %v224 = vpop.permute.xlu0 %223
      %225 = vrot.lane.b32.xlu0 %v219, 17
      %v226 = vpop.permute.xlu0 %225
      %vm227 = vcmask 138240
      %v228 = vsel %vm227, %v224, %v226
      %v232 = vsel %vm227, 0.0, %v224
      %v233 = vsel %vm227, %v226, 0.0
      %v234 = vmul.f32 %v232, %v202
      %v235 = vmul.f32 %v228, %v203
      %238 = vrot.lane.b32.xlu0 %v208, 2
      %v239 = vpop.permute.xlu0 %238
      %240 = vrot.lane.b32.xlu0 %v209, 2
      %v241 = vpop.permute.xlu0 %240
      %vm242 = vcmask 15360
      %v243 = vsel %vm242, %v239, %v241
      %v247 = vmul.f32 %v232, %v239
      %v248 = vmul.f32 %v228, %v243
      %v249 = vmul.f32 %v233, %v241
      %252 = vrot.lane.b32.xlu0 %v202, 16
      %v253 = vpop.permute.xlu0 %252
      %254 = vrot.lane.b32.xlu0 %v203, 16
      %v255 = vpop.permute.xlu0 %254
      %vm256 = vcmask 130048
      %v257 = vsel %vm256, %v253, %v255
      %v261 = vmul.f32 %v232, %v253
      %v262 = vmul.f32 %v228, %v257
      %v263 = vmul.f32 %v233, %v255
      %264 = vrot.lane.b32.xlu0 %v208, 18
      %v265 = vpop.permute.xlu0 %264
      %266 = vrot.lane.b32.xlu0 %v209, 18
      %v267 = vpop.permute.xlu0 %266
      %vm268 = vcmask 146432
      %v269 = vsel %vm268, %v265, %v267
      %v273 = vmul.f32 %v232, %v265
      %v274 = vmul.f32 %v228, %v269
      %v275 = vmul.f32 %v233, %v267
      %276 = vrot.lane.b32.xlu0 %v202, 32
      %v277 = vpop.permute.xlu0 %276
      %278 = vrot.lane.b32.xlu0 %v203, 32
      %v279 = vpop.permute.xlu0 %278
      %vm280 = vcmask 261120
      %v281 = vsel %vm280, %v277, %v279
      %v285 = vmul.f32 %v232, %v277
      %v286 = vmul.f32 %v228, %v281
      %v287 = vmul.f32 %v233, %v279
      %288 = vrot.lane.b32.xlu0 %v208, 34
      %v289 = vpop.permute.xlu0 %288
      %290 = vrot.lane.b32.xlu0 %v209, 34
      %v291 = vpop.permute.xlu0 %290
      %vm292 = vcmask 277504
      %v293 = vsel %vm292, %v289, %v291
      %v297 = vmul.f32 %v232, %v289
      %v298 = vmul.f32 %v228, %v293
      %v299 = vmul.f32 %v233, %v291
      %302 = vrot.lane.b32.xlu0 %v232, 127
      %v303 = vpop.permute.xlu0 %302
      %304 = vrot.lane.b32.xlu0 %v228, 127
      %v305 = vpop.permute.xlu0 %304
      %306 = vrot.lane.b32.xlu0 %v233, 127
      %v307 = vpop.permute.xlu0 %306
      %vm308 = vcmask 1039360
      %v309 = vsel %vm308, %v303, %v305
      %v310 = vsel %vm308, %v305, %v307
      %316 = vrot.lane.b32.xlu0 %v247, 126
      %v317 = vpop.permute.xlu0 %316
      %318 = vrot.lane.b32.xlu0 %v248, 126
      %v319 = vpop.permute.xlu0 %318
      %320 = vrot.lane.b32.xlu0 %v249, 126
      %v321 = vpop.permute.xlu0 %320
      %vm322 = vcmask 1031168
      %v323 = vsel %vm322, %v317, %v319
      %v324 = vsel %vm322, %v319, %v321
      %330 = vrot.lane.b32.xlu0 %v261, 112
      %v331 = vpop.permute.xlu0 %330
      %332 = vrot.lane.b32.xlu0 %v262, 112
      %v333 = vpop.permute.xlu0 %332
      %334 = vrot.lane.b32.xlu0 %v263, 112
      %v335 = vpop.permute.xlu0 %334
      %vm336 = vcmask 916480
      %v337 = vsel %vm336, %v331, %v333
      %v338 = vsel %vm336, %v333, %v335
      %341 = vrot.lane.b32.xlu0 %v232, 111
      %v342 = vpop.permute.xlu0 %341
      %343 = vrot.lane.b32.xlu0 %v228, 111
      %v344 = vpop.permute.xlu0 %343
      %345 = vrot.lane.b32.xlu0 %v233, 111
      %v346 = vpop.permute.xlu0 %345
      %vm347 = vcmask 908288
      %v348 = vsel %vm347, %v342, %v344
      %v349 = vsel %vm347, %v344, %v346
      %355 = vrot.lane.b32.xlu0 %v273, 110
      %v356 = vpop.permute.xlu0 %355
      %357 = vrot.lane.b32.xlu0 %v274, 110
      %v358 = vpop.permute.xlu0 %357
      %359 = vrot.lane.b32.xlu0 %v275, 110
      %v360 = vpop.permute.xlu0 %359
      %vm361 = vcmask 900096
      %v362 = vsel %vm361, %v356, %v358
      %v363 = vsel %vm361, %v358, %v360
      %369 = vrot.lane.b32.xlu0 %v285, 96
      %v370 = vpop.permute.xlu0 %369
      %371 = vrot.lane.b32.xlu0 %v286, 96
      %v372 = vpop.permute.xlu0 %371
      %373 = vrot.lane.b32.xlu0 %v287, 96
      %v374 = vpop.permute.xlu0 %373
      %vm375 = vcmask 785408
      %v376 = vsel %vm375, %v370, %v372
      %v377 = vsel %vm375, %v372, %v374
      %380 = vrot.lane.b32.xlu0 %v232, 95
      %v381 = vpop.permute.xlu0 %380
      %382 = vrot.lane.b32.xlu0 %v228, 95
      %v383 = vpop.permute.xlu0 %382
      %384 = vrot.lane.b32.xlu0 %v233, 95
      %v385 = vpop.permute.xlu0 %384
      %vm386 = vcmask 777216
      %v387 = vsel %vm386, %v381, %v383
      %v388 = vsel %vm386, %v383, %v385
      %394 = vrot.lane.b32.xlu0 %v297, 94
      %v395 = vpop.permute.xlu0 %394
      %396 = vrot.lane.b32.xlu0 %v298, 94
      %v397 = vpop.permute.xlu0 %396
      %398 = vrot.lane.b32.xlu0 %v299, 94
      %v399 = vpop.permute.xlu0 %398
      %vm400 = vcmask 769024
      %v401 = vsel %vm400, %v395, %v397
      %v402 = vsel %vm400, %v397, %v399
      %vm405 = vcmask 596992
      %v407 = vsel %vm405, %v220, 0
      %vm409 = vcmask 1040384
      %v411 = vsel %vm409, 1.0, 0
      %413 = vmatpush.msra.mxu0 0.0
      %414 = vmatpush.msra.mxu0 0.0
      %415 = vmatpush.msra.mxu0 0.0
      %416 = vmatpush.msra.mxu0 0.0
      %417 = vmatpush.msra.mxu0 0.0
      %418 = vmatpush.msra.mxu0 0.0
      %419 = vmatpush.msra.mxu0 %v411
      %420 = vmatpush.msra.mxu0 %v401
      %421 = vmatpush.msra.mxu0 %v387
      %422 = vmatpush.msra.mxu0 %v376
      %423 = vmatpush.msra.mxu0 %v362
      %424 = vmatpush.msra.mxu0 %v348
      %425 = vmatpush.msra.mxu0 %v337
      %426 = vmatpush.msra.mxu0 %v323
      %427 = vmatpush.msra.mxu0 %v309
      %428 = vmatpush.msra.mxu0 %v234
      %429 = vmatmul.f32.gmra.mxu0 %v407
      %v430 = vpop.f32.mrf.mxu0
      %v431 = vadd.f32 0.0, %v430
      %432 = vdwg.mxu0
      %433 = vmatpush.msra.mxu0 0.0
      %434 = vmatpush.msra.mxu0 0.0
      %435 = vmatpush.msra.mxu0 0.0
      %436 = vmatpush.msra.mxu0 0.0
      %437 = vmatpush.msra.mxu0 0.0
      %438 = vmatpush.msra.mxu0 0.0
      %439 = vmatpush.msra.mxu0 %v411
      %440 = vmatpush.msra.mxu0 %v402
      %441 = vmatpush.msra.mxu0 %v388
      %442 = vmatpush.msra.mxu0 %v377
      %443 = vmatpush.msra.mxu0 %v363
      %444 = vmatpush.msra.mxu0 %v349
      %445 = vmatpush.msra.mxu0 %v338
      %446 = vmatpush.msra.mxu0 %v324
      %447 = vmatpush.msra.mxu0 %v310
      %448 = vmatpush.msra.mxu0 %v235
      %449 = vmatmul.f32.gmra.mxu0 %v407
      %v450 = vpop.f32.mrf.mxu0
      %v451 = vadd.f32 0.0, %v450
      %452 = vdwg.mxu0
      %v453 = vld [vmem:[%s2 + $0x8] sm:$0xff]
      %456 = vrot.lane.b32.xlu0 %v431, 17
      %v457 = vpop.permute.xlu0 %456
      %458 = vrot.lane.b32.xlu0 %v451, 17
      %v459 = vpop.permute.xlu0 %458
      %v460 = vsel %vm227, %v457, %v459
      %v464 = vsel %vm227, 0.0, %v457
      %v465 = vsel %vm227, %v459, 0.0
      %v466 = vmul.f32 %v464, %v202
      %v467 = vmul.f32 %v460, %v203
      %v468 = vmul.f32 %v464, %v239
      %v469 = vmul.f32 %v460, %v243
      %v470 = vmul.f32 %v465, %v241
      %v471 = vmul.f32 %v464, %v253
      %v472 = vmul.f32 %v460, %v257
      %v473 = vmul.f32 %v465, %v255
      %v474 = vmul.f32 %v464, %v265
      %v475 = vmul.f32 %v460, %v269
      %v476 = vmul.f32 %v465, %v267
      %v477 = vmul.f32 %v464, %v277
      %v478 = vmul.f32 %v460, %v281
      %v479 = vmul.f32 %v465, %v279
      %v480 = vmul.f32 %v464, %v289
      %v481 = vmul.f32 %v460, %v293
      %v482 = vmul.f32 %v465, %v291
      %485 = vrot.lane.b32.xlu0 %v464, 127
      %v486 = vpop.permute.xlu0 %485
      %487 = vrot.lane.b32.xlu0 %v460, 127
      %v488 = vpop.permute.xlu0 %487
      %489 = vrot.lane.b32.xlu0 %v465, 127
      %v490 = vpop.permute.xlu0 %489
      %v491 = vsel %vm308, %v486, %v488
      %v492 = vsel %vm308, %v488, %v490
      %498 = vrot.lane.b32.xlu0 %v468, 126
      %v499 = vpop.permute.xlu0 %498
      %500 = vrot.lane.b32.xlu0 %v469, 126
      %v501 = vpop.permute.xlu0 %500
      %502 = vrot.lane.b32.xlu0 %v470, 126
      %v503 = vpop.permute.xlu0 %502
      %v504 = vsel %vm322, %v499, %v501
      %v505 = vsel %vm322, %v501, %v503
      %511 = vrot.lane.b32.xlu0 %v471, 112
      %v512 = vpop.permute.xlu0 %511
      %513 = vrot.lane.b32.xlu0 %v472, 112
      %v514 = vpop.permute.xlu0 %513
      %515 = vrot.lane.b32.xlu0 %v473, 112
      %v516 = vpop.permute.xlu0 %515
      %v517 = vsel %vm336, %v512, %v514
      %v518 = vsel %vm336, %v514, %v516
      %521 = vrot.lane.b32.xlu0 %v464, 111
      %v522 = vpop.permute.xlu0 %521
      %523 = vrot.lane.b32.xlu0 %v460, 111
      %v524 = vpop.permute.xlu0 %523
      %525 = vrot.lane.b32.xlu0 %v465, 111
      %v526 = vpop.permute.xlu0 %525
      %v527 = vsel %vm347, %v522, %v524
      %v528 = vsel %vm347, %v524, %v526
      %534 = vrot.lane.b32.xlu0 %v474, 110
      %v535 = vpop.permute.xlu0 %534
      %536 = vrot.lane.b32.xlu0 %v475, 110
      %v537 = vpop.permute.xlu0 %536
      %538 = vrot.lane.b32.xlu0 %v476, 110
      %v539 = vpop.permute.xlu0 %538
      %v540 = vsel %vm361, %v535, %v537
      %v541 = vsel %vm361, %v537, %v539
      %547 = vrot.lane.b32.xlu0 %v477, 96
      %v548 = vpop.permute.xlu0 %547
      %549 = vrot.lane.b32.xlu0 %v478, 96
      %v550 = vpop.permute.xlu0 %549
      %551 = vrot.lane.b32.xlu0 %v479, 96
      %v552 = vpop.permute.xlu0 %551
      %v553 = vsel %vm375, %v548, %v550
      %v554 = vsel %vm375, %v550, %v552
      %557 = vrot.lane.b32.xlu0 %v464, 95
      %v558 = vpop.permute.xlu0 %557
      %559 = vrot.lane.b32.xlu0 %v460, 95
      %v560 = vpop.permute.xlu0 %559
      %561 = vrot.lane.b32.xlu0 %v465, 95
      %v562 = vpop.permute.xlu0 %561
      %v563 = vsel %vm386, %v558, %v560
      %v564 = vsel %vm386, %v560, %v562
      %570 = vrot.lane.b32.xlu0 %v480, 94
      %v571 = vpop.permute.xlu0 %570
      %572 = vrot.lane.b32.xlu0 %v481, 94
      %v573 = vpop.permute.xlu0 %572
      %574 = vrot.lane.b32.xlu0 %v482, 94
      %v575 = vpop.permute.xlu0 %574
      %v576 = vsel %vm400, %v571, %v573
      %v577 = vsel %vm400, %v573, %v575
      %v581 = vsel %vm405, %v453, 0
      %583 = vmatpush.msra.mxu0 0.0
      %584 = vmatpush.msra.mxu0 0.0
      %585 = vmatpush.msra.mxu0 0.0
      %586 = vmatpush.msra.mxu0 0.0
      %587 = vmatpush.msra.mxu0 0.0
      %588 = vmatpush.msra.mxu0 0.0
      %589 = vmatpush.msra.mxu0 %v411
      %590 = vmatpush.msra.mxu0 %v576
      %591 = vmatpush.msra.mxu0 %v563
      %592 = vmatpush.msra.mxu0 %v553
      %593 = vmatpush.msra.mxu0 %v540
      %594 = vmatpush.msra.mxu0 %v527
      %595 = vmatpush.msra.mxu0 %v517
      %596 = vmatpush.msra.mxu0 %v504
      %597 = vmatpush.msra.mxu0 %v491
      %598 = vmatpush.msra.mxu0 %v466
      %599 = vmatmul.f32.gmra.mxu0 %v581
      %v600 = vpop.f32.mrf.mxu0
      %v601 = vadd.f32 0.0, %v600
      %602 = vdwg.mxu0
      %603 = vmatpush.msra.mxu0 0.0
      %604 = vmatpush.msra.mxu0 0.0
      %605 = vmatpush.msra.mxu0 0.0
      %606 = vmatpush.msra.mxu0 0.0
      %607 = vmatpush.msra.mxu0 0.0
      %608 = vmatpush.msra.mxu0 0.0
      %609 = vmatpush.msra.mxu0 %v411
      %610 = vmatpush.msra.mxu0 %v577
      %611 = vmatpush.msra.mxu0 %v564
      %612 = vmatpush.msra.mxu0 %v554
      %613 = vmatpush.msra.mxu0 %v541
      %614 = vmatpush.msra.mxu0 %v528
      %615 = vmatpush.msra.mxu0 %v518
      %616 = vmatpush.msra.mxu0 %v505
      %617 = vmatpush.msra.mxu0 %v492
      %618 = vmatpush.msra.mxu0 %v467
      %619 = vmatmul.f32.gmra.mxu0 %v581
      %v620 = vpop.f32.mrf.mxu0
      %v621 = vadd.f32 0.0, %v620
      %622 = vdwg.mxu0
      %v623 = vmax.f32 %v601, 0.0
      %v624 = vmax.f32 %v621, 0.0
      %v625 = vld [vmem:[%s2 + $0x10] sm:$0xff]
      %628 = vrot.lane.b32.xlu0 %v623, 17
      %v629 = vpop.permute.xlu0 %628
      %630 = vrot.lane.b32.xlu0 %v624, 17
      %v631 = vpop.permute.xlu0 %630
      %v632 = vsel %vm227, %v629, %v631
      %v636 = vsel %vm227, 0.0, %v629
      %v637 = vsel %vm227, %v631, 0.0
      %v638 = vmul.f32 %v636, %v202
      %v639 = vmul.f32 %v632, %v203
      %v640 = vmul.f32 %v636, %v239
      %v641 = vmul.f32 %v632, %v243
      %v642 = vmul.f32 %v637, %v241
      %v643 = vmul.f32 %v636, %v253
      %v644 = vmul.f32 %v632, %v257
      %v645 = vmul.f32 %v637, %v255
      %v646 = vmul.f32 %v636, %v265
      %v647 = vmul.f32 %v632, %v269
      %v648 = vmul.f32 %v637, %v267
      %v649 = vmul.f32 %v636, %v277
      %v650 = vmul.f32 %v632, %v281
      %v651 = vmul.f32 %v637, %v279
      %v652 = vmul.f32 %v636, %v289
      %v653 = vmul.f32 %v632, %v293
      %v654 = vmul.f32 %v637, %v291
      %657 = vrot.lane.b32.xlu0 %v636, 127
      %v658 = vpop.permute.xlu0 %657
      %659 = vrot.lane.b32.xlu0 %v632, 127
      %v660 = vpop.permute.xlu0 %659
      %661 = vrot.lane.b32.xlu0 %v637, 127
      %v662 = vpop.permute.xlu0 %661
      %v663 = vsel %vm308, %v658, %v660
      %v664 = vsel %vm308, %v660, %v662
      %670 = vrot.lane.b32.xlu0 %v640, 126
      %v671 = vpop.permute.xlu0 %670
      %672 = vrot.lane.b32.xlu0 %v641, 126
      %v673 = vpop.permute.xlu0 %672
      %674 = vrot.lane.b32.xlu0 %v642, 126
      %v675 = vpop.permute.xlu0 %674
      %v676 = vsel %vm322, %v671, %v673
      %v677 = vsel %vm322, %v673, %v675
      %683 = vrot.lane.b32.xlu0 %v643, 112
      %v684 = vpop.permute.xlu0 %683
      %685 = vrot.lane.b32.xlu0 %v644, 112
      %v686 = vpop.permute.xlu0 %685
      %687 = vrot.lane.b32.xlu0 %v645, 112
      %v688 = vpop.permute.xlu0 %687
      %v689 = vsel %vm336, %v684, %v686
      %v690 = vsel %vm336, %v686, %v688
      %693 = vrot.lane.b32.xlu0 %v636, 111
      %v694 = vpop.permute.xlu0 %693
      %695 = vrot.lane.b32.xlu0 %v632, 111
      %v696 = vpop.permute.xlu0 %695
      %697 = vrot.lane.b32.xlu0 %v637, 111
      %v698 = vpop.permute.xlu0 %697
      %v699 = vsel %vm347, %v694, %v696
      %v700 = vsel %vm347, %v696, %v698
      %706 = vrot.lane.b32.xlu0 %v646, 110
      %v707 = vpop.permute.xlu0 %706
      %708 = vrot.lane.b32.xlu0 %v647, 110
      %v709 = vpop.permute.xlu0 %708
      %710 = vrot.lane.b32.xlu0 %v648, 110
      %v711 = vpop.permute.xlu0 %710
      %v712 = vsel %vm361, %v707, %v709
      %v713 = vsel %vm361, %v709, %v711
      %719 = vrot.lane.b32.xlu0 %v649, 96
      %v720 = vpop.permute.xlu0 %719
      %721 = vrot.lane.b32.xlu0 %v650, 96
      %v722 = vpop.permute.xlu0 %721
      %723 = vrot.lane.b32.xlu0 %v651, 96
      %v724 = vpop.permute.xlu0 %723
      %v725 = vsel %vm375, %v720, %v722
      %v726 = vsel %vm375, %v722, %v724
      %729 = vrot.lane.b32.xlu0 %v636, 95
      %v730 = vpop.permute.xlu0 %729
      %731 = vrot.lane.b32.xlu0 %v632, 95
      %v732 = vpop.permute.xlu0 %731
      %733 = vrot.lane.b32.xlu0 %v637, 95
      %v734 = vpop.permute.xlu0 %733
      %v735 = vsel %vm386, %v730, %v732
      %v736 = vsel %vm386, %v732, %v734
      %742 = vrot.lane.b32.xlu0 %v652, 94
      %v743 = vpop.permute.xlu0 %742
      %744 = vrot.lane.b32.xlu0 %v653, 94
      %v745 = vpop.permute.xlu0 %744
      %746 = vrot.lane.b32.xlu0 %v654, 94
      %v747 = vpop.permute.xlu0 %746
      %v748 = vsel %vm400, %v743, %v745
      %v749 = vsel %vm400, %v745, %v747
      %v753 = vsel %vm405, %v625, 0
      %755 = vmatpush.msra.mxu0 0.0
      %756 = vmatpush.msra.mxu0 0.0
      %757 = vmatpush.msra.mxu0 0.0
      %758 = vmatpush.msra.mxu0 0.0
      %759 = vmatpush.msra.mxu0 0.0
      %760 = vmatpush.msra.mxu0 0.0
      %761 = vmatpush.msra.mxu0 %v411
      %762 = vmatpush.msra.mxu0 %v748
      %763 = vmatpush.msra.mxu0 %v735
      %764 = vmatpush.msra.mxu0 %v725
      %765 = vmatpush.msra.mxu0 %v712
      %766 = vmatpush.msra.mxu0 %v699
      %767 = vmatpush.msra.mxu0 %v689
      %768 = vmatpush.msra.mxu0 %v676
      %769 = vmatpush.msra.mxu0 %v663
      %770 = vmatpush.msra.mxu0 %v638
      %771 = vmatmul.f32.gmra.mxu0 %v753
      %v772 = vpop.f32.mrf.mxu0
      %v773 = vadd.f32 0.0, %v772
      %774 = vdwg.mxu0
      %775 = vmatpush.msra.mxu0 0.0
      %776 = vmatpush.msra.mxu0 0.0
      %777 = vmatpush.msra.mxu0 0.0
      %778 = vmatpush.msra.mxu0 0.0
      %779 = vmatpush.msra.mxu0 0.0
      %780 = vmatpush.msra.mxu0 0.0
      %781 = vmatpush.msra.mxu0 %v411
      %782 = vmatpush.msra.mxu0 %v749
      %783 = vmatpush.msra.mxu0 %v736
      %784 = vmatpush.msra.mxu0 %v726
      %785 = vmatpush.msra.mxu0 %v713
      %786 = vmatpush.msra.mxu0 %v700
      %787 = vmatpush.msra.mxu0 %v690
      %788 = vmatpush.msra.mxu0 %v677
      %789 = vmatpush.msra.mxu0 %v664
      %790 = vmatpush.msra.mxu0 %v639
      %791 = vmatmul.f32.gmra.mxu0 %v753
      %v792 = vpop.f32.mrf.mxu0
      %v793 = vadd.f32 0.0, %v792
      %794 = vdwg.mxu0
      %v795 = vmul.f32 %v773, 0.1
      %v796 = vmul.f32 %v793, 0.1
      %v797 = vadd.f32 %v431, %v795
      %v798 = vadd.f32 %v451, %v796
      %v799 = vld [vmem:[%s2 + $0x18] sm:$0xff]
      %802 = vrot.lane.b32.xlu0 %v797, 17
      %v803 = vpop.permute.xlu0 %802
      %804 = vrot.lane.b32.xlu0 %v798, 17
      %v805 = vpop.permute.xlu0 %804
      %v806 = vsel %vm227, %v803, %v805
      %v810 = vsel %vm227, 0.0, %v803
      %v811 = vsel %vm227, %v805, 0.0
      %v812 = vmul.f32 %v810, %v202
      %v813 = vmul.f32 %v806, %v203
      %v814 = vmul.f32 %v810, %v239
      %v815 = vmul.f32 %v806, %v243
      %v816 = vmul.f32 %v811, %v241
      %v817 = vmul.f32 %v810, %v253
      %v818 = vmul.f32 %v806, %v257
      %v819 = vmul.f32 %v811, %v255
      %v820 = vmul.f32 %v810, %v265
      %v821 = vmul.f32 %v806, %v269
      %v822 = vmul.f32 %v811, %v267
      %v823 = vmul.f32 %v810, %v277
      %v824 = vmul.f32 %v806, %v281
      %v825 = vmul.f32 %v811, %v279
      %v826 = vmul.f32 %v810, %v289
      %v827 = vmul.f32 %v806, %v293
      %v828 = vmul.f32 %v811, %v291
      %831 = vrot.lane.b32.xlu0 %v810, 127
      %v832 = vpop.permute.xlu0 %831
      %833 = vrot.lane.b32.xlu0 %v806, 127
      %v834 = vpop.permute.xlu0 %833
      %835 = vrot.lane.b32.xlu0 %v811, 127
      %v836 = vpop.permute.xlu0 %835
      %v837 = vsel %vm308, %v832, %v834
      %v838 = vsel %vm308, %v834, %v836
      %844 = vrot.lane.b32.xlu0 %v814, 126
      %v845 = vpop.permute.xlu0 %844
      %846 = vrot.lane.b32.xlu0 %v815, 126
      %v847 = vpop.permute.xlu0 %846
      %848 = vrot.lane.b32.xlu0 %v816, 126
      %v849 = vpop.permute.xlu0 %848
      %v850 = vsel %vm322, %v845, %v847
      %v851 = vsel %vm322, %v847, %v849
      %857 = vrot.lane.b32.xlu0 %v817, 112
      %v858 = vpop.permute.xlu0 %857
      %859 = vrot.lane.b32.xlu0 %v818, 112
      %v860 = vpop.permute.xlu0 %859
      %861 = vrot.lane.b32.xlu0 %v819, 112
      %v862 = vpop.permute.xlu0 %861
      %v863 = vsel %vm336, %v858, %v860
      %v864 = vsel %vm336, %v860, %v862
      %867 = vrot.lane.b32.xlu0 %v810, 111
      %v868 = vpop.permute.xlu0 %867
      %869 = vrot.lane.b32.xlu0 %v806, 111
      %v870 = vpop.permute.xlu0 %869
      %871 = vrot.lane.b32.xlu0 %v811, 111
      %v872 = vpop.permute.xlu0 %871
      %v873 = vsel %vm347, %v868, %v870
      %v874 = vsel %vm347, %v870, %v872
      %880 = vrot.lane.b32.xlu0 %v820, 110
      %v881 = vpop.permute.xlu0 %880
      %882 = vrot.lane.b32.xlu0 %v821, 110
      %v883 = vpop.permute.xlu0 %882
      %884 = vrot.lane.b32.xlu0 %v822, 110
      %v885 = vpop.permute.xlu0 %884
      %v886 = vsel %vm361, %v881, %v883
      %v887 = vsel %vm361, %v883, %v885
      %893 = vrot.lane.b32.xlu0 %v823, 96
      %v894 = vpop.permute.xlu0 %893
      %895 = vrot.lane.b32.xlu0 %v824, 96
      %v896 = vpop.permute.xlu0 %895
      %897 = vrot.lane.b32.xlu0 %v825, 96
      %v898 = vpop.permute.xlu0 %897
      %v899 = vsel %vm375, %v894, %v896
      %v900 = vsel %vm375, %v896, %v898
      %903 = vrot.lane.b32.xlu0 %v810, 95
      %v904 = vpop.permute.xlu0 %903
      %905 = vrot.lane.b32.xlu0 %v806, 95
      %v906 = vpop.permute.xlu0 %905
      %907 = vrot.lane.b32.xlu0 %v811, 95
      %v908 = vpop.permute.xlu0 %907
      %v909 = vsel %vm386, %v904, %v906
      %v910 = vsel %vm386, %v906, %v908
      %916 = vrot.lane.b32.xlu0 %v826, 94
      %v917 = vpop.permute.xlu0 %916
      %918 = vrot.lane.b32.xlu0 %v827, 94
      %v919 = vpop.permute.xlu0 %918
      %920 = vrot.lane.b32.xlu0 %v828, 94
      %v921 = vpop.permute.xlu0 %920
      %v922 = vsel %vm400, %v917, %v919
      %v923 = vsel %vm400, %v919, %v921
      %v927 = vsel %vm405, %v799, 0
      %929 = vmatpush.msra.mxu0 0.0
      %930 = vmatpush.msra.mxu0 0.0
      %931 = vmatpush.msra.mxu0 0.0
      %932 = vmatpush.msra.mxu0 0.0
      %933 = vmatpush.msra.mxu0 0.0
      %934 = vmatpush.msra.mxu0 0.0
      %935 = vmatpush.msra.mxu0 %v411
      %936 = vmatpush.msra.mxu0 %v922
      %937 = vmatpush.msra.mxu0 %v909
      %938 = vmatpush.msra.mxu0 %v899
      %939 = vmatpush.msra.mxu0 %v886
      %940 = vmatpush.msra.mxu0 %v873
      %941 = vmatpush.msra.mxu0 %v863
      %942 = vmatpush.msra.mxu0 %v850
      %943 = vmatpush.msra.mxu0 %v837
      %944 = vmatpush.msra.mxu0 %v812
      %945 = vmatmul.f32.gmra.mxu0 %v927
      %v946 = vpop.f32.mrf.mxu0
      %v947 = vadd.f32 0.0, %v946
      %948 = vdwg.mxu0
      %949 = vmatpush.msra.mxu0 0.0
      %950 = vmatpush.msra.mxu0 0.0
      %951 = vmatpush.msra.mxu0 0.0
      %952 = vmatpush.msra.mxu0 0.0
      %953 = vmatpush.msra.mxu0 0.0
      %954 = vmatpush.msra.mxu0 0.0
      %955 = vmatpush.msra.mxu0 %v411
      %956 = vmatpush.msra.mxu0 %v923
      %957 = vmatpush.msra.mxu0 %v910
      %958 = vmatpush.msra.mxu0 %v900
      %959 = vmatpush.msra.mxu0 %v887
      %960 = vmatpush.msra.mxu0 %v874
      %961 = vmatpush.msra.mxu0 %v864
      %962 = vmatpush.msra.mxu0 %v851
      %963 = vmatpush.msra.mxu0 %v838
      %964 = vmatpush.msra.mxu0 %v813
      %965 = vmatmul.f32.gmra.mxu0 %v927
      %v966 = vpop.f32.mrf.mxu0
      %v967 = vadd.f32 0.0, %v966
      %968 = vdwg.mxu0
      %v969 = vmax.f32 %v947, 0.0
      %v970 = vmax.f32 %v967, 0.0
      %v971 = vld [vmem:[%s2 + $0x20] sm:$0xff]
      %974 = vrot.lane.b32.xlu0 %v969, 17
      %v975 = vpop.permute.xlu0 %974
      %976 = vrot.lane.b32.xlu0 %v970, 17
      %v977 = vpop.permute.xlu0 %976
      %v978 = vsel %vm227, %v975, %v977
      %v982 = vsel %vm227, 0.0, %v975
      %v983 = vsel %vm227, %v977, 0.0
      %v984 = vmul.f32 %v982, %v202
      %v985 = vmul.f32 %v978, %v203
      %v986 = vmul.f32 %v982, %v239
      %v987 = vmul.f32 %v978, %v243
      %v988 = vmul.f32 %v983, %v241
      %v989 = vmul.f32 %v982, %v253
      %v990 = vmul.f32 %v978, %v257
      %v991 = vmul.f32 %v983, %v255
      %v992 = vmul.f32 %v982, %v265
      %v993 = vmul.f32 %v978, %v269
      %v994 = vmul.f32 %v983, %v267
      %v995 = vmul.f32 %v982, %v277
      %v996 = vmul.f32 %v978, %v281
      %v997 = vmul.f32 %v983, %v279
      %v998 = vmul.f32 %v982, %v289
      %v999 = vmul.f32 %v978, %v293
      %v1000 = vmul.f32 %v983, %v291
      %1003 = vrot.lane.b32.xlu0 %v982, 127
      %v1004 = vpop.permute.xlu0 %1003
      %1005 = vrot.lane.b32.xlu0 %v978, 127
      %v1006 = vpop.permute.xlu0 %1005
      %1007 = vrot.lane.b32.xlu0 %v983, 127
      %v1008 = vpop.permute.xlu0 %1007
      %v1009 = vsel %vm308, %v1004, %v1006
      %v1010 = vsel %vm308, %v1006, %v1008
      %1016 = vrot.lane.b32.xlu0 %v986, 126
      %v1017 = vpop.permute.xlu0 %1016
      %1018 = vrot.lane.b32.xlu0 %v987, 126
      %v1019 = vpop.permute.xlu0 %1018
      %1020 = vrot.lane.b32.xlu0 %v988, 126
      %v1021 = vpop.permute.xlu0 %1020
      %v1022 = vsel %vm322, %v1017, %v1019
      %v1023 = vsel %vm322, %v1019, %v1021
      %1029 = vrot.lane.b32.xlu0 %v989, 112
      %v1030 = vpop.permute.xlu0 %1029
      %1031 = vrot.lane.b32.xlu0 %v990, 112
      %v1032 = vpop.permute.xlu0 %1031
      %1033 = vrot.lane.b32.xlu0 %v991, 112
      %v1034 = vpop.permute.xlu0 %1033
      %v1035 = vsel %vm336, %v1030, %v1032
      %v1036 = vsel %vm336, %v1032, %v1034
      %1039 = vrot.lane.b32.xlu0 %v982, 111
      %v1040 = vpop.permute.xlu0 %1039
      %1041 = vrot.lane.b32.xlu0 %v978, 111
      %v1042 = vpop.permute.xlu0 %1041
      %1043 = vrot.lane.b32.xlu0 %v983, 111
      %v1044 = vpop.permute.xlu0 %1043
      %v1045 = vsel %vm347, %v1040, %v1042
      %v1046 = vsel %vm347, %v1042, %v1044
      %1052 = vrot.lane.b32.xlu0 %v992, 110
      %v1053 = vpop.permute.xlu0 %1052
      %1054 = vrot.lane.b32.xlu0 %v993, 110
      %v1055 = vpop.permute.xlu0 %1054
      %1056 = vrot.lane.b32.xlu0 %v994, 110
      %v1057 = vpop.permute.xlu0 %1056
      %v1058 = vsel %vm361, %v1053, %v1055
      %v1059 = vsel %vm361, %v1055, %v1057
      %1065 = vrot.lane.b32.xlu0 %v995, 96
      %v1066 = vpop.permute.xlu0 %1065
      %1067 = vrot.lane.b32.xlu0 %v996, 96
      %v1068 = vpop.permute.xlu0 %1067
      %1069 = vrot.lane.b32.xlu0 %v997, 96
      %v1070 = vpop.permute.xlu0 %1069
      %v1071 = vsel %vm375, %v1066, %v1068
      %v1072 = vsel %vm375, %v1068, %v1070
      %1075 = vrot.lane.b32.xlu0 %v982, 95
      %v1076 = vpop.permute.xlu0 %1075
      %1077 = vrot.lane.b32.xlu0 %v978, 95
      %v1078 = vpop.permute.xlu0 %1077
      %1079 = vrot.lane.b32.xlu0 %v983, 95
      %v1080 = vpop.permute.xlu0 %1079
      %v1081 = vsel %vm386, %v1076, %v1078
      %v1082 = vsel %vm386, %v1078, %v1080
      %1088 = vrot.lane.b32.xlu0 %v998, 94
      %v1089 = vpop.permute.xlu0 %1088
      %1090 = vrot.lane.b32.xlu0 %v999, 94
      %v1091 = vpop.permute.xlu0 %1090
      %1092 = vrot.lane.b32.xlu0 %v1000, 94
      %v1093 = vpop.permute.xlu0 %1092
      %v1094 = vsel %vm400, %v1089, %v1091
      %v1095 = vsel %vm400, %v1091, %v1093
      %v1099 = vsel %vm405, %v971, 0
      %1101 = vmatpush.msra.mxu0 0.0
      %1102 = vmatpush.msra.mxu0 0.0
      %1103 = vmatpush.msra.mxu0 0.0
      %1104 = vmatpush.msra.mxu0 0.0
      %1105 = vmatpush.msra.mxu0 0.0
      %1106 = vmatpush.msra.mxu0 0.0
      %1107 = vmatpush.msra.mxu0 %v411
      %1108 = vmatpush.msra.mxu0 %v1094
      %1109 = vmatpush.msra.mxu0 %v1081
      %1110 = vmatpush.msra.mxu0 %v1071
      %1111 = vmatpush.msra.mxu0 %v1058
      %1112 = vmatpush.msra.mxu0 %v1045
      %1113 = vmatpush.msra.mxu0 %v1035
      %1114 = vmatpush.msra.mxu0 %v1022
      %1115 = vmatpush.msra.mxu0 %v1009
      %1116 = vmatpush.msra.mxu0 %v984
      %1117 = vmatmul.f32.gmra.mxu0 %v1099
      %v1118 = vpop.f32.mrf.mxu0
      %v1119 = vadd.f32 0.0, %v1118
      %1120 = vdwg.mxu0
      %1121 = vmatpush.msra.mxu0 0.0
      %1122 = vmatpush.msra.mxu0 0.0
      %1123 = vmatpush.msra.mxu0 0.0
      %1124 = vmatpush.msra.mxu0 0.0
      %1125 = vmatpush.msra.mxu0 0.0
      %1126 = vmatpush.msra.mxu0 0.0
      %1127 = vmatpush.msra.mxu0 %v411
      %1128 = vmatpush.msra.mxu0 %v1095
      %1129 = vmatpush.msra.mxu0 %v1082
      %1130 = vmatpush.msra.mxu0 %v1072
      %1131 = vmatpush.msra.mxu0 %v1059
      %1132 = vmatpush.msra.mxu0 %v1046
      %1133 = vmatpush.msra.mxu0 %v1036
      %1134 = vmatpush.msra.mxu0 %v1023
      %1135 = vmatpush.msra.mxu0 %v1010
      %1136 = vmatpush.msra.mxu0 %v985
      %1137 = vmatmul.f32.gmra.mxu0 %v1099
      %v1138 = vpop.f32.mrf.mxu0
      %v1139 = vadd.f32 0.0, %v1138
      %1140 = vdwg.mxu0
      %v1141 = vmul.f32 %v1119, 0.1
      %v1142 = vmul.f32 %v1139, 0.1
      %v1143 = vadd.f32 %v797, %v1141
      %v1144 = vadd.f32 %v798, %v1142
      %v1145 = vld [vmem:[%s2 + $0x28] sm:$0xff]
      %1148 = vrot.lane.b32.xlu0 %v1143, 17
      %v1149 = vpop.permute.xlu0 %1148
      %1150 = vrot.lane.b32.xlu0 %v1144, 17
      %v1151 = vpop.permute.xlu0 %1150
      %v1152 = vsel %vm227, %v1149, %v1151
      %v1156 = vsel %vm227, 0.0, %v1149
      %v1157 = vsel %vm227, %v1151, 0.0
      %v1158 = vmul.f32 %v1156, %v202
      %v1159 = vmul.f32 %v1152, %v203
      %v1160 = vmul.f32 %v1156, %v239
      %v1161 = vmul.f32 %v1152, %v243
      %v1162 = vmul.f32 %v1157, %v241
      %v1163 = vmul.f32 %v1156, %v253
      %v1164 = vmul.f32 %v1152, %v257
      %v1165 = vmul.f32 %v1157, %v255
      %v1166 = vmul.f32 %v1156, %v265
      %v1167 = vmul.f32 %v1152, %v269
      %v1168 = vmul.f32 %v1157, %v267
      %v1169 = vmul.f32 %v1156, %v277
      %v1170 = vmul.f32 %v1152, %v281
      %v1171 = vmul.f32 %v1157, %v279
      %v1172 = vmul.f32 %v1156, %v289
      %v1173 = vmul.f32 %v1152, %v293
      %v1174 = vmul.f32 %v1157, %v291
      %1177 = vrot.lane.b32.xlu0 %v1156, 127
      %v1178 = vpop.permute.xlu0 %1177
      %1179 = vrot.lane.b32.xlu0 %v1152, 127
      %v1180 = vpop.permute.xlu0 %1179
      %1181 = vrot.lane.b32.xlu0 %v1157, 127
      %v1182 = vpop.permute.xlu0 %1181
      %v1183 = vsel %vm308, %v1178, %v1180
      %v1184 = vsel %vm308, %v1180, %v1182
      %1190 = vrot.lane.b32.xlu0 %v1160, 126
      %v1191 = vpop.permute.xlu0 %1190
      %1192 = vrot.lane.b32.xlu0 %v1161, 126
      %v1193 = vpop.permute.xlu0 %1192
      %1194 = vrot.lane.b32.xlu0 %v1162, 126
      %v1195 = vpop.permute.xlu0 %1194
      %v1196 = vsel %vm322, %v1191, %v1193
      %v1197 = vsel %vm322, %v1193, %v1195
      %1203 = vrot.lane.b32.xlu0 %v1163, 112
      %v1204 = vpop.permute.xlu0 %1203
      %1205 = vrot.lane.b32.xlu0 %v1164, 112
      %v1206 = vpop.permute.xlu0 %1205
      %1207 = vrot.lane.b32.xlu0 %v1165, 112
      %v1208 = vpop.permute.xlu0 %1207
      %v1209 = vsel %vm336, %v1204, %v1206
      %v1210 = vsel %vm336, %v1206, %v1208
      %1213 = vrot.lane.b32.xlu0 %v1156, 111
      %v1214 = vpop.permute.xlu0 %1213
      %1215 = vrot.lane.b32.xlu0 %v1152, 111
      %v1216 = vpop.permute.xlu0 %1215
      %1217 = vrot.lane.b32.xlu0 %v1157, 111
      %v1218 = vpop.permute.xlu0 %1217
      %v1219 = vsel %vm347, %v1214, %v1216
      %v1220 = vsel %vm347, %v1216, %v1218
      %1226 = vrot.lane.b32.xlu0 %v1166, 110
      %v1227 = vpop.permute.xlu0 %1226
      %1228 = vrot.lane.b32.xlu0 %v1167, 110
      %v1229 = vpop.permute.xlu0 %1228
      %1230 = vrot.lane.b32.xlu0 %v1168, 110
      %v1231 = vpop.permute.xlu0 %1230
      %v1232 = vsel %vm361, %v1227, %v1229
      %v1233 = vsel %vm361, %v1229, %v1231
      %1239 = vrot.lane.b32.xlu0 %v1169, 96
      %v1240 = vpop.permute.xlu0 %1239
      %1241 = vrot.lane.b32.xlu0 %v1170, 96
      %v1242 = vpop.permute.xlu0 %1241
      %1243 = vrot.lane.b32.xlu0 %v1171, 96
      %v1244 = vpop.permute.xlu0 %1243
      %v1245 = vsel %vm375, %v1240, %v1242
      %v1246 = vsel %vm375, %v1242, %v1244
      %1249 = vrot.lane.b32.xlu0 %v1156, 95
      %v1250 = vpop.permute.xlu0 %1249
      %1251 = vrot.lane.b32.xlu0 %v1152, 95
      %v1252 = vpop.permute.xlu0 %1251
      %1253 = vrot.lane.b32.xlu0 %v1157, 95
      %v1254 = vpop.permute.xlu0 %1253
      %v1255 = vsel %vm386, %v1250, %v1252
      %v1256 = vsel %vm386, %v1252, %v1254
      %1262 = vrot.lane.b32.xlu0 %v1172, 94
      %v1263 = vpop.permute.xlu0 %1262
      %1264 = vrot.lane.b32.xlu0 %v1173, 94
      %v1265 = vpop.permute.xlu0 %1264
      %1266 = vrot.lane.b32.xlu0 %v1174, 94
      %v1267 = vpop.permute.xlu0 %1266
      %v1268 = vsel %vm400, %v1263, %v1265
      %v1269 = vsel %vm400, %v1265, %v1267
      %v1273 = vsel %vm405, %v1145, 0
      %1275 = vmatpush.msra.mxu0 0.0
      %1276 = vmatpush.msra.mxu0 0.0
      %1277 = vmatpush.msra.mxu0 0.0
      %1278 = vmatpush.msra.mxu0 0.0
      %1279 = vmatpush.msra.mxu0 0.0
      %1280 = vmatpush.msra.mxu0 0.0
      %1281 = vmatpush.msra.mxu0 %v411
      %1282 = vmatpush.msra.mxu0 %v1268
      %1283 = vmatpush.msra.mxu0 %v1255
      %1284 = vmatpush.msra.mxu0 %v1245
      %1285 = vmatpush.msra.mxu0 %v1232
      %1286 = vmatpush.msra.mxu0 %v1219
      %1287 = vmatpush.msra.mxu0 %v1209
      %1288 = vmatpush.msra.mxu0 %v1196
      %1289 = vmatpush.msra.mxu0 %v1183
      %1290 = vmatpush.msra.mxu0 %v1158
      %1291 = vmatmul.f32.gmra.mxu0 %v1273
      %v1292 = vpop.f32.mrf.mxu0
      %v1293 = vadd.f32 %v431, %v1292
      %1294 = vdwg.mxu0
      %1295 = vmatpush.msra.mxu0 0.0
      %1296 = vmatpush.msra.mxu0 0.0
      %1297 = vmatpush.msra.mxu0 0.0
      %1298 = vmatpush.msra.mxu0 0.0
      %1299 = vmatpush.msra.mxu0 0.0
      %1300 = vmatpush.msra.mxu0 0.0
      %1301 = vmatpush.msra.mxu0 %v411
      %1302 = vmatpush.msra.mxu0 %v1269
      %1303 = vmatpush.msra.mxu0 %v1256
      %1304 = vmatpush.msra.mxu0 %v1246
      %1305 = vmatpush.msra.mxu0 %v1233
      %1306 = vmatpush.msra.mxu0 %v1220
      %1307 = vmatpush.msra.mxu0 %v1210
      %1308 = vmatpush.msra.mxu0 %v1197
      %1309 = vmatpush.msra.mxu0 %v1184
      %1310 = vmatpush.msra.mxu0 %v1159
      %1311 = vmatmul.f32.gmra.mxu0 %v1273
      %v1312 = vpop.f32.mrf.mxu0
      %v1313 = vadd.f32 %v451, %v1312
      %1314 = vdwg.mxu0
      %v1315 = vld [vmem:[%s2 + $0x30] sm:$0xff]
      %v1316 = vld [vmem:[%s2 + $0x38] sm:$0xff]
      %v1317 = vld [vmem:[%s2 + $0x40] sm:$0xff]
      %v1318 = vld [vmem:[%s2 + $0x48] sm:$0xff]
      %1321 = vrot.lane.b32.xlu0 %v1293, 17
      %v1322 = vpop.permute.xlu0 %1321
      %1323 = vrot.lane.b32.xlu0 %v1313, 17
      %v1324 = vpop.permute.xlu0 %1323
      %v1325 = vsel %vm227, %v1322, %v1324
      %v1329 = vsel %vm227, 0.0, %v1322
      %v1330 = vsel %vm227, %v1324, 0.0
      %v1331 = vmul.f32 %v1329, %v202
      %v1332 = vmul.f32 %v1325, %v203
      %v1333 = vmul.f32 %v1329, %v239
      %v1334 = vmul.f32 %v1325, %v243
      %v1335 = vmul.f32 %v1330, %v241
      %v1336 = vmul.f32 %v1329, %v253
      %v1337 = vmul.f32 %v1325, %v257
      %v1338 = vmul.f32 %v1330, %v255
      %v1339 = vmul.f32 %v1329, %v265
      %v1340 = vmul.f32 %v1325, %v269
      %v1341 = vmul.f32 %v1330, %v267
      %v1342 = vmul.f32 %v1329, %v277
      %v1343 = vmul.f32 %v1325, %v281
      %v1344 = vmul.f32 %v1330, %v279
      %v1345 = vmul.f32 %v1329, %v289
      %v1346 = vmul.f32 %v1325, %v293
      %v1347 = vmul.f32 %v1330, %v291
      %1350 = vrot.lane.b32.xlu0 %v1329, 127
      %v1351 = vpop.permute.xlu0 %1350
      %1352 = vrot.lane.b32.xlu0 %v1325, 127
      %v1353 = vpop.permute.xlu0 %1352
      %1354 = vrot.lane.b32.xlu0 %v1330, 127
      %v1355 = vpop.permute.xlu0 %1354
      %v1356 = vsel %vm308, %v1351, %v1353
      %v1357 = vsel %vm308, %v1353, %v1355
      %1363 = vrot.lane.b32.xlu0 %v1333, 126
      %v1364 = vpop.permute.xlu0 %1363
      %1365 = vrot.lane.b32.xlu0 %v1334, 126
      %v1366 = vpop.permute.xlu0 %1365
      %1367 = vrot.lane.b32.xlu0 %v1335, 126
      %v1368 = vpop.permute.xlu0 %1367
      %v1369 = vsel %vm322, %v1364, %v1366
      %v1370 = vsel %vm322, %v1366, %v1368
      %1376 = vrot.lane.b32.xlu0 %v1336, 112
      %v1377 = vpop.permute.xlu0 %1376
      %1378 = vrot.lane.b32.xlu0 %v1337, 112
      %v1379 = vpop.permute.xlu0 %1378
      %1380 = vrot.lane.b32.xlu0 %v1338, 112
      %v1381 = vpop.permute.xlu0 %1380
      %v1382 = vsel %vm336, %v1377, %v1379
      %v1383 = vsel %vm336, %v1379, %v1381
      %1386 = vrot.lane.b32.xlu0 %v1329, 111
      %v1387 = vpop.permute.xlu0 %1386
      %1388 = vrot.lane.b32.xlu0 %v1325, 111
      %v1389 = vpop.permute.xlu0 %1388
      %1390 = vrot.lane.b32.xlu0 %v1330, 111
      %v1391 = vpop.permute.xlu0 %1390
      %v1392 = vsel %vm347, %v1387, %v1389
      %v1393 = vsel %vm347, %v1389, %v1391
      %1399 = vrot.lane.b32.xlu0 %v1339, 110
      %v1400 = vpop.permute.xlu0 %1399
      %1401 = vrot.lane.b32.xlu0 %v1340, 110
      %v1402 = vpop.permute.xlu0 %1401
      %1403 = vrot.lane.b32.xlu0 %v1341, 110
      %v1404 = vpop.permute.xlu0 %1403
      %v1405 = vsel %vm361, %v1400, %v1402
      %v1406 = vsel %vm361, %v1402, %v1404
      %1412 = vrot.lane.b32.xlu0 %v1342, 96
      %v1413 = vpop.permute.xlu0 %1412
      %1414 = vrot.lane.b32.xlu0 %v1343, 96
      %v1415 = vpop.permute.xlu0 %1414
      %1416 = vrot.lane.b32.xlu0 %v1344, 96
      %v1417 = vpop.permute.xlu0 %1416
      %v1418 = vsel %vm375, %v1413, %v1415
      %v1419 = vsel %vm375, %v1415, %v1417
      %1422 = vrot.lane.b32.xlu0 %v1329, 95
      %v1423 = vpop.permute.xlu0 %1422
      %1424 = vrot.lane.b32.xlu0 %v1325, 95
      %v1425 = vpop.permute.xlu0 %1424
      %1426 = vrot.lane.b32.xlu0 %v1330, 95
      %v1427 = vpop.permute.xlu0 %1426
      %v1428 = vsel %vm386, %v1423, %v1425
      %v1429 = vsel %vm386, %v1425, %v1427
      %1435 = vrot.lane.b32.xlu0 %v1345, 94
      %v1436 = vpop.permute.xlu0 %1435
      %1437 = vrot.lane.b32.xlu0 %v1346, 94
      %v1438 = vpop.permute.xlu0 %1437
      %1439 = vrot.lane.b32.xlu0 %v1347, 94
      %v1440 = vpop.permute.xlu0 %1439
      %v1441 = vsel %vm400, %v1436, %v1438
      %v1442 = vsel %vm400, %v1438, %v1440
      %v1446 = vsel %vm405, %v1315, 0
      %v1449 = vsel %vm405, %v1316, 0
      %v1452 = vsel %vm405, %v1317, 0
      %v1455 = vsel %vm405, %v1318, 0
      %1457 = vmatpush.msra.mxu0 0.0
      %1458 = vmatpush.msra.mxu0 0.0
      %1459 = vmatpush.msra.mxu0 0.0
      %1460 = vmatpush.msra.mxu0 0.0
      %1461 = vmatpush.msra.mxu0 0.0
      %1462 = vmatpush.msra.mxu0 0.0
      %1463 = vmatpush.msra.mxu0 %v411
      %1464 = vmatpush.msra.mxu0 %v1441
      %1465 = vmatpush.msra.mxu0 %v1428
      %1466 = vmatpush.msra.mxu0 %v1418
      %1467 = vmatpush.msra.mxu0 %v1405
      %1468 = vmatpush.msra.mxu0 %v1392
      %1469 = vmatpush.msra.mxu0 %v1382
      %1470 = vmatpush.msra.mxu0 %v1369
      %1471 = vmatpush.msra.mxu0 %v1356
      %1472 = vmatpush.msra.mxu0 %v1331
      %1473 = vmatmul.f32.gmra.mxu0 %v1446
      %v1474 = vpop.f32.mrf.mxu0
      %v1475 = vadd.f32 0.0, %v1474
      %1476 = vmatmul.f32.gmra.mxu0 %v1449
      %v1477 = vpop.f32.mrf.mxu0
      %v1478 = vadd.f32 0.0, %v1477
      %1479 = vmatmul.f32.gmra.mxu0 %v1452
      %v1480 = vpop.f32.mrf.mxu0
      %v1481 = vadd.f32 0.0, %v1480
      %1482 = vmatmul.f32.gmra.mxu0 %v1455
      %v1483 = vpop.f32.mrf.mxu0
      %v1484 = vadd.f32 0.0, %v1483
      %1485 = vdwg.mxu0
      %1486 = vmatpush.msra.mxu0 0.0
      %1487 = vmatpush.msra.mxu0 0.0
      %1488 = vmatpush.msra.mxu0 0.0
      %1489 = vmatpush.msra.mxu0 0.0
      %1490 = vmatpush.msra.mxu0 0.0
      %1491 = vmatpush.msra.mxu0 0.0
      %1492 = vmatpush.msra.mxu0 %v411
      %1493 = vmatpush.msra.mxu0 %v1442
      %1494 = vmatpush.msra.mxu0 %v1429
      %1495 = vmatpush.msra.mxu0 %v1419
      %1496 = vmatpush.msra.mxu0 %v1406
      %1497 = vmatpush.msra.mxu0 %v1393
      %1498 = vmatpush.msra.mxu0 %v1383
      %1499 = vmatpush.msra.mxu0 %v1370
      %1500 = vmatpush.msra.mxu0 %v1357
      %1501 = vmatpush.msra.mxu0 %v1332
      %1502 = vmatmul.f32.gmra.mxu0 %v1446
      %v1503 = vpop.f32.mrf.mxu0
      %v1504 = vadd.f32 0.0, %v1503
      %1505 = vmatmul.f32.gmra.mxu0 %v1449
      %v1506 = vpop.f32.mrf.mxu0
      %v1507 = vadd.f32 0.0, %v1506
      %1508 = vmatmul.f32.gmra.mxu0 %v1452
      %v1509 = vpop.f32.mrf.mxu0
      %v1510 = vadd.f32 0.0, %v1509
      %1511 = vmatmul.f32.gmra.mxu0 %v1455
      %v1512 = vpop.f32.mrf.mxu0
      %v1513 = vadd.f32 0.0, %v1512
      %1514 = vdwg.mxu0
      %v1515 = vld [vmem:[%s2 + $0x50] sm:$0x7]
      %1518 = vrot.lane.b32.xlu0 %v1475, 17
      %v1519 = vpop.permute.xlu0 %1518
      %1520 = vrot.lane.b32.xlu0 %v1504, 17
      %v1521 = vpop.permute.xlu0 %1520
      %v1522 = vsel %vm227, %v1519, %v1521
      %v1526 = vsel %vm227, 0.0, %v1519
      %v1527 = vsel %vm227, %v1521, 0.0
      %1530 = vrot.lane.b32.xlu0 %v1478, 17
      %v1531 = vpop.permute.xlu0 %1530
      %1532 = vrot.lane.b32.xlu0 %v1507, 17
      %v1533 = vpop.permute.xlu0 %1532
      %v1534 = vsel %vm227, %v1531, %v1533
      %v1538 = vsel %vm227, 0.0, %v1531
      %v1539 = vsel %vm227, %v1533, 0.0
      %1542 = vrot.lane.b32.xlu0 %v1481, 17
      %v1543 = vpop.permute.xlu0 %1542
      %1544 = vrot.lane.b32.xlu0 %v1510, 17
      %v1545 = vpop.permute.xlu0 %1544
      %v1546 = vsel %vm227, %v1543, %v1545
      %v1550 = vsel %vm227, 0.0, %v1543
      %v1551 = vsel %vm227, %v1545, 0.0
      %1554 = vrot.lane.b32.xlu0 %v1484, 17
      %v1555 = vpop.permute.xlu0 %1554
      %1556 = vrot.lane.b32.xlu0 %v1513, 17
      %v1557 = vpop.permute.xlu0 %1556
      %v1558 = vsel %vm227, %v1555, %v1557
      %v1562 = vsel %vm227, 0.0, %v1555
      %v1563 = vsel %vm227, %v1557, 0.0
      %v1564 = vmul.f32 %v1562, %v202
      %v1565 = vmul.f32 %v1558, %v203
      %v1566 = vmul.f32 %v1538, %v253
      %v1567 = vmul.f32 %v1534, %v257
      %v1568 = vmul.f32 %v1539, %v255
      %v1569 = vmul.f32 %v1562, %v253
      %v1570 = vmul.f32 %v1558, %v257
      %v1571 = vmul.f32 %v1563, %v255
      %1574 = vrot.lane.b32.xlu0 %v1550, 127
      %v1575 = vpop.permute.xlu0 %1574
      %1576 = vrot.lane.b32.xlu0 %v1546, 127
      %v1577 = vpop.permute.xlu0 %1576
      %1578 = vrot.lane.b32.xlu0 %v1551, 127
      %v1579 = vpop.permute.xlu0 %1578
      %v1580 = vsel %vm308, %v1575, %v1577
      %v1581 = vsel %vm308, %v1577, %v1579
      %1586 = vrot.lane.b32.xlu0 %v1562, 127
      %v1587 = vpop.permute.xlu0 %1586
      %1588 = vrot.lane.b32.xlu0 %v1558, 127
      %v1589 = vpop.permute.xlu0 %1588
      %1590 = vrot.lane.b32.xlu0 %v1563, 127
      %v1591 = vpop.permute.xlu0 %1590
      %v1592 = vsel %vm308, %v1587, %v1589
      %v1593 = vsel %vm308, %v1589, %v1591
      %1599 = vrot.lane.b32.xlu0 %v1566, 112
      %v1600 = vpop.permute.xlu0 %1599
      %1601 = vrot.lane.b32.xlu0 %v1567, 112
      %v1602 = vpop.permute.xlu0 %1601
      %1603 = vrot.lane.b32.xlu0 %v1568, 112
      %v1604 = vpop.permute.xlu0 %1603
      %v1605 = vsel %vm336, %v1600, %v1602
      %v1606 = vsel %vm336, %v1602, %v1604
      %1611 = vrot.lane.b32.xlu0 %v1526, 111
      %v1612 = vpop.permute.xlu0 %1611
      %1613 = vrot.lane.b32.xlu0 %v1522, 111
      %v1614 = vpop.permute.xlu0 %1613
      %1615 = vrot.lane.b32.xlu0 %v1527, 111
      %v1616 = vpop.permute.xlu0 %1615
      %v1617 = vsel %vm347, %v1612, %v1614
      %v1618 = vsel %vm347, %v1614, %v1616
      %1623 = vrot.lane.b32.xlu0 %v1538, 111
      %v1624 = vpop.permute.xlu0 %1623
      %1625 = vrot.lane.b32.xlu0 %v1534, 111
      %v1626 = vpop.permute.xlu0 %1625
      %1627 = vrot.lane.b32.xlu0 %v1539, 111
      %v1628 = vpop.permute.xlu0 %1627
      %v1629 = vsel %vm347, %v1624, %v1626
      %v1630 = vsel %vm347, %v1626, %v1628
      %1636 = vrot.lane.b32.xlu0 %v1569, 112
      %v1637 = vpop.permute.xlu0 %1636
      %1638 = vrot.lane.b32.xlu0 %v1570, 112
      %v1639 = vpop.permute.xlu0 %1638
      %1640 = vrot.lane.b32.xlu0 %v1571, 112
      %v1641 = vpop.permute.xlu0 %1640
      %v1642 = vsel %vm336, %v1637, %v1639
      %v1643 = vsel %vm336, %v1639, %v1641
      %1646 = vrot.lane.b32.xlu0 %v1550, 111
      %v1647 = vpop.permute.xlu0 %1646
      %1648 = vrot.lane.b32.xlu0 %v1546, 111
      %v1649 = vpop.permute.xlu0 %1648
      %1650 = vrot.lane.b32.xlu0 %v1551, 111
      %v1651 = vpop.permute.xlu0 %1650
      %v1652 = vsel %vm347, %v1647, %v1649
      %v1653 = vsel %vm347, %v1649, %v1651
      %1656 = vrot.lane.b32.xlu0 %v1562, 111
      %v1657 = vpop.permute.xlu0 %1656
      %1658 = vrot.lane.b32.xlu0 %v1558, 111
      %v1659 = vpop.permute.xlu0 %1658
      %1660 = vrot.lane.b32.xlu0 %v1563, 111
      %v1661 = vpop.permute.xlu0 %1660
      %v1662 = vsel %vm347, %v1657, %v1659
      %v1663 = vsel %vm347, %v1659, %v1661
      %v1667 = vsel %vm405, %v1515, 0
      %1669 = vmatpush.msra.mxu0 0.0
      %1670 = vmatpush.msra.mxu0 0.0
      %1671 = vmatpush.msra.mxu0 0.0
      %1672 = vmatpush.msra.mxu0 0.0
      %1673 = vmatpush.msra.mxu0 0.0
      %1674 = vmatpush.msra.mxu0 0.0
      %1675 = vmatpush.msra.mxu0 %v411
      %1676 = vmatpush.msra.mxu0 %v1662
      %1677 = vmatpush.msra.mxu0 %v1652
      %1678 = vmatpush.msra.mxu0 %v1642
      %1679 = vmatpush.msra.mxu0 %v1629
      %1680 = vmatpush.msra.mxu0 %v1617
      %1681 = vmatpush.msra.mxu0 %v1605
      %1682 = vmatpush.msra.mxu0 %v1592
      %1683 = vmatpush.msra.mxu0 %v1580
      %1684 = vmatpush.msra.mxu0 %v1564
      %1685 = vmatmul.f32.gmra.mxu0 %v1667
      %v1686 = vpop.f32.mrf.mxu0
      %v1687 = vadd.f32 0.0, %v1686
      %1688 = vdwg.mxu0
      %1689 = vmatpush.msra.mxu0 0.0
      %1690 = vmatpush.msra.mxu0 0.0
      %1691 = vmatpush.msra.mxu0 0.0
      %1692 = vmatpush.msra.mxu0 0.0
      %1693 = vmatpush.msra.mxu0 0.0
      %1694 = vmatpush.msra.mxu0 0.0
      %1695 = vmatpush.msra.mxu0 %v411
      %1696 = vmatpush.msra.mxu0 %v1663
      %1697 = vmatpush.msra.mxu0 %v1653
      %1698 = vmatpush.msra.mxu0 %v1643
      %1699 = vmatpush.msra.mxu0 %v1630
      %1700 = vmatpush.msra.mxu0 %v1618
      %1701 = vmatpush.msra.mxu0 %v1606
      %1702 = vmatpush.msra.mxu0 %v1593
      %1703 = vmatpush.msra.mxu0 %v1581
      %1704 = vmatpush.msra.mxu0 %v1565
      %1705 = vmatmul.f32.gmra.mxu0 %v1667
      %v1706 = vpop.f32.mrf.mxu0
      %v1707 = vadd.f32 0.0, %v1706
      %1708 = vdwg.mxu0
      %v1709 = vmax.f32 %v1687, 0.0
      %v1710 = vmax.f32 %v1707, 0.0
      %v1711 = vmul.f32 %v1550, %v239
      %v1712 = vmul.f32 %v1546, %v243
      %v1713 = vmul.f32 %v1551, %v241
      %v1714 = vmul.f32 %v1526, %v265
      %v1715 = vmul.f32 %v1522, %v269
      %v1716 = vmul.f32 %v1527, %v267
      %v1717 = vmul.f32 %v1550, %v265
      %v1718 = vmul.f32 %v1546, %v269
      %v1719 = vmul.f32 %v1551, %v267
      %1723 = vrot.lane.b32.xlu0 %v1711, 127
      %v1724 = vpop.permute.xlu0 %1723
      %1725 = vrot.lane.b32.xlu0 %v1712, 127
      %v1726 = vpop.permute.xlu0 %1725
      %1727 = vrot.lane.b32.xlu0 %v1713, 127
      %v1728 = vpop.permute.xlu0 %1727
      %v1729 = vsel %vm308, %v1724, %v1726
      %v1730 = vsel %vm308, %v1726, %v1728
      %1731 = vrot.lane.b32.xlu0 %v1526, 112
      %v1732 = vpop.permute.xlu0 %1731
      %1733 = vrot.lane.b32.xlu0 %v1522, 112
      %v1734 = vpop.permute.xlu0 %1733
      %1735 = vrot.lane.b32.xlu0 %v1527, 112
      %v1736 = vpop.permute.xlu0 %1735
      %v1737 = vsel %vm336, %v1732, %v1734
      %v1738 = vsel %vm336, %v1734, %v1736
      %1739 = vrot.lane.b32.xlu0 %v1538, 112
      %v1740 = vpop.permute.xlu0 %1739
      %1741 = vrot.lane.b32.xlu0 %v1534, 112
      %v1742 = vpop.permute.xlu0 %1741
      %1743 = vrot.lane.b32.xlu0 %v1539, 112
      %v1744 = vpop.permute.xlu0 %1743
      %v1745 = vsel %vm336, %v1740, %v1742
      %v1746 = vsel %vm336, %v1742, %v1744
      %1750 = vrot.lane.b32.xlu0 %v1714, 111
      %v1751 = vpop.permute.xlu0 %1750
      %1752 = vrot.lane.b32.xlu0 %v1715, 111
      %v1753 = vpop.permute.xlu0 %1752
      %1754 = vrot.lane.b32.xlu0 %v1716, 111
      %v1755 = vpop.permute.xlu0 %1754
      %v1756 = vsel %vm347, %v1751, %v1753
      %v1757 = vsel %vm347, %v1753, %v1755
      %1758 = vrot.lane.b32.xlu0 %v1550, 112
      %v1759 = vpop.permute.xlu0 %1758
      %1760 = vrot.lane.b32.xlu0 %v1546, 112
      %v1761 = vpop.permute.xlu0 %1760
      %1762 = vrot.lane.b32.xlu0 %v1551, 112
      %v1763 = vpop.permute.xlu0 %1762
      %v1764 = vsel %vm336, %v1759, %v1761
      %v1765 = vsel %vm336, %v1761, %v1763
      %1766 = vrot.lane.b32.xlu0 %v1562, 112
      %v1767 = vpop.permute.xlu0 %1766
      %1768 = vrot.lane.b32.xlu0 %v1558, 112
      %v1769 = vpop.permute.xlu0 %1768
      %1770 = vrot.lane.b32.xlu0 %v1563, 112
      %v1771 = vpop.permute.xlu0 %1770
      %v1772 = vsel %vm336, %v1767, %v1769
      %v1773 = vsel %vm336, %v1769, %v1771
      %1777 = vrot.lane.b32.xlu0 %v1717, 111
      %v1778 = vpop.permute.xlu0 %1777
      %1779 = vrot.lane.b32.xlu0 %v1718, 111
      %v1780 = vpop.permute.xlu0 %1779
      %1781 = vrot.lane.b32.xlu0 %v1719, 111
      %v1782 = vpop.permute.xlu0 %1781
      %v1783 = vsel %vm347, %v1778, %v1780
      %v1784 = vsel %vm347, %v1780, %v1782
      %1785 = vrot.lane.b32.xlu0 %v1729, 127
      %v1786 = vpop.permute.xlu0 %1785
      %1787 = vrot.lane.b32.xlu0 %v1730, 127
      %v1788 = vpop.permute.xlu0 %1787
      %1789 = vrot.lane.b32.xlu0 %v1728, 127
      %v1790 = vpop.permute.xlu0 %1789
      %1791 = vrot.lane.b32.xlu0 %v1737, 127
      %v1792 = vpop.permute.xlu0 %1791
      %1793 = vrot.lane.b32.xlu0 %v1738, 127
      %v1794 = vpop.permute.xlu0 %1793
      %1795 = vrot.lane.b32.xlu0 %v1736, 127
      %v1796 = vpop.permute.xlu0 %1795
      %1797 = vrot.lane.b32.xlu0 %v1745, 127
      %v1798 = vpop.permute.xlu0 %1797
      %1799 = vrot.lane.b32.xlu0 %v1746, 127
      %v1800 = vpop.permute.xlu0 %1799
      %1801 = vrot.lane.b32.xlu0 %v1744, 127
      %v1802 = vpop.permute.xlu0 %1801
      %1803 = vrot.lane.b32.xlu0 %v1756, 127
      %v1804 = vpop.permute.xlu0 %1803
      %1805 = vrot.lane.b32.xlu0 %v1757, 127
      %v1806 = vpop.permute.xlu0 %1805
      %1807 = vrot.lane.b32.xlu0 %v1755, 127
      %v1808 = vpop.permute.xlu0 %1807
      %1809 = vrot.lane.b32.xlu0 %v1764, 127
      %v1810 = vpop.permute.xlu0 %1809
      %1811 = vrot.lane.b32.xlu0 %v1765, 127
      %v1812 = vpop.permute.xlu0 %1811
      %1813 = vrot.lane.b32.xlu0 %v1763, 127
      %v1814 = vpop.permute.xlu0 %1813
      %1815 = vrot.lane.b32.xlu0 %v1772, 127
      %v1816 = vpop.permute.xlu0 %1815
      %1817 = vrot.lane.b32.xlu0 %v1773, 127
      %v1818 = vpop.permute.xlu0 %1817
      %1819 = vrot.lane.b32.xlu0 %v1771, 127
      %v1820 = vpop.permute.xlu0 %1819
      %1821 = vrot.lane.b32.xlu0 %v1783, 127
      %v1822 = vpop.permute.xlu0 %1821
      %1823 = vrot.lane.b32.xlu0 %v1784, 127
      %v1824 = vpop.permute.xlu0 %1823
      %1825 = vrot.lane.b32.xlu0 %v1782, 127
      %v1826 = vpop.permute.xlu0 %1825
      %1827 = vrot.lane.b32.xlu0 1.0, 127
      %v1828 = vpop.permute.xlu0 %1827
      %v1829 = vsel %vm308, %v1786, %v1788
      %v1830 = vsel %vm308, %v1788, %v1790
      %v1831 = vsel %vm308, %v1792, %v1794
      %v1832 = vsel %vm308, %v1794, %v1796
      %v1833 = vsel %vm308, %v1798, %v1800
      %v1834 = vsel %vm308, %v1800, %v1802
      %v1835 = vsel %vm308, %v1804, %v1806
      %v1836 = vsel %vm308, %v1806, %v1808
      %v1837 = vsel %vm308, %v1810, %v1812
      %v1838 = vsel %vm308, %v1812, %v1814
      %v1839 = vsel %vm308, %v1816, %v1818
      %v1840 = vsel %vm308, %v1818, %v1820
      %v1841 = vsel %vm308, %v1822, %v1824
      %v1842 = vsel %vm308, %v1824, %v1826
      %v1857 = vsel %vm409, %v1828, 0
      %1859 = vmatpush.msra.mxu0 0.0
      %1860 = vmatpush.msra.mxu0 0.0
      %1861 = vmatpush.msra.mxu0 0.0
      %1862 = vmatpush.msra.mxu0 0.0
      %1863 = vmatpush.msra.mxu0 0.0
      %1864 = vmatpush.msra.mxu0 0.0
      %1865 = vmatpush.msra.mxu0 %v1857
      %1866 = vmatpush.msra.mxu0 %v1841
      %1867 = vmatpush.msra.mxu0 %v1839
      %1868 = vmatpush.msra.mxu0 %v1837
      %1869 = vmatpush.msra.mxu0 %v1835
      %1870 = vmatpush.msra.mxu0 %v1833
      %1871 = vmatpush.msra.mxu0 %v1831
      %1872 = vmatpush.msra.mxu0 %v1829
      %1873 = vmatpush.msra.mxu0 %v1592
      %1874 = vmatpush.msra.mxu0 %v1580
      %1875 = vmatmul.f32.gmra.mxu0 %v1667
      %v1876 = vpop.f32.mrf.mxu0
      %v1877 = vadd.f32 0.0, %v1876
      %1878 = vdwg.mxu0
      %1879 = vmatpush.msra.mxu0 0.0
      %1880 = vmatpush.msra.mxu0 0.0
      %1881 = vmatpush.msra.mxu0 0.0
      %1882 = vmatpush.msra.mxu0 0.0
      %1883 = vmatpush.msra.mxu0 0.0
      %1884 = vmatpush.msra.mxu0 0.0
      %1885 = vmatpush.msra.mxu0 %v1857
      %1886 = vmatpush.msra.mxu0 %v1842
      %1887 = vmatpush.msra.mxu0 %v1840
      %1888 = vmatpush.msra.mxu0 %v1838
      %1889 = vmatpush.msra.mxu0 %v1836
      %1890 = vmatpush.msra.mxu0 %v1834
      %1891 = vmatpush.msra.mxu0 %v1832
      %1892 = vmatpush.msra.mxu0 %v1830
      %1893 = vmatpush.msra.mxu0 %v1593
      %1894 = vmatpush.msra.mxu0 %v1581
      %1895 = vmatmul.f32.gmra.mxu0 %v1667
      %v1896 = vpop.f32.mrf.mxu0
      %v1897 = vadd.f32 0.0, %v1896
      %1898 = vdwg.mxu0
      %v1899 = vmax.f32 %v1877, 0.0
      %v1900 = vmax.f32 %v1897, 0.0
      %v1901 = vmul.f32 %v1538, %v277
      %v1902 = vmul.f32 %v1534, %v281
      %v1903 = vmul.f32 %v1539, %v279
      %1904 = vrot.lane.b32.xlu0 %v1526, 127
      %v1905 = vpop.permute.xlu0 %1904
      %1906 = vrot.lane.b32.xlu0 %v1522, 127
      %v1907 = vpop.permute.xlu0 %1906
      %1908 = vrot.lane.b32.xlu0 %v1527, 127
      %v1909 = vpop.permute.xlu0 %1908
      %v1910 = vsel %vm308, %v1905, %v1907
      %v1911 = vsel %vm308, %v1907, %v1909
      %1912 = vrot.lane.b32.xlu0 %v1538, 127
      %v1913 = vpop.permute.xlu0 %1912
      %1914 = vrot.lane.b32.xlu0 %v1534, 127
      %v1915 = vpop.permute.xlu0 %1914
      %1916 = vrot.lane.b32.xlu0 %v1539, 127
      %v1917 = vpop.permute.xlu0 %1916
      %v1918 = vsel %vm308, %v1913, %v1915
      %v1919 = vsel %vm308, %v1915, %v1917
      %1923 = vrot.lane.b32.xlu0 %v1901, 112
      %v1924 = vpop.permute.xlu0 %1923
      %1925 = vrot.lane.b32.xlu0 %v1902, 112
      %v1926 = vpop.permute.xlu0 %1925
      %1927 = vrot.lane.b32.xlu0 %v1903, 112
      %v1928 = vpop.permute.xlu0 %1927
      %v1929 = vsel %vm336, %v1924, %v1926
      %v1930 = vsel %vm336, %v1926, %v1928
      %1931 = vrot.lane.b32.xlu0 %v1910, 112
      %v1932 = vpop.permute.xlu0 %1931
      %1933 = vrot.lane.b32.xlu0 %v1911, 112
      %v1934 = vpop.permute.xlu0 %1933
      %1935 = vrot.lane.b32.xlu0 %v1909, 112
      %v1936 = vpop.permute.xlu0 %1935
      %1937 = vrot.lane.b32.xlu0 %v1918, 112
      %v1938 = vpop.permute.xlu0 %1937
      %1939 = vrot.lane.b32.xlu0 %v1919, 112
      %v1940 = vpop.permute.xlu0 %1939
      %1941 = vrot.lane.b32.xlu0 %v1917, 112
      %v1942 = vpop.permute.xlu0 %1941
      %1943 = vrot.lane.b32.xlu0 %v1580, 112
      %v1944 = vpop.permute.xlu0 %1943
      %1945 = vrot.lane.b32.xlu0 %v1581, 112
      %v1946 = vpop.permute.xlu0 %1945
      %1947 = vrot.lane.b32.xlu0 %v1579, 112
      %v1948 = vpop.permute.xlu0 %1947
      %1949 = vrot.lane.b32.xlu0 %v1592, 112
      %v1950 = vpop.permute.xlu0 %1949
      %1951 = vrot.lane.b32.xlu0 %v1593, 112
      %v1952 = vpop.permute.xlu0 %1951
      %1953 = vrot.lane.b32.xlu0 %v1591, 112
      %v1954 = vpop.permute.xlu0 %1953
      %1955 = vrot.lane.b32.xlu0 %v1929, 112
      %v1956 = vpop.permute.xlu0 %1955
      %1957 = vrot.lane.b32.xlu0 %v1930, 112
      %v1958 = vpop.permute.xlu0 %1957
      %1959 = vrot.lane.b32.xlu0 %v1928, 112
      %v1960 = vpop.permute.xlu0 %1959
      %1961 = vrot.lane.b32.xlu0 %v1617, 112
      %v1962 = vpop.permute.xlu0 %1961
      %1963 = vrot.lane.b32.xlu0 %v1618, 112
      %v1964 = vpop.permute.xlu0 %1963
      %1965 = vrot.lane.b32.xlu0 %v1616, 112
      %v1966 = vpop.permute.xlu0 %1965
      %1967 = vrot.lane.b32.xlu0 %v1629, 112
      %v1968 = vpop.permute.xlu0 %1967
      %1969 = vrot.lane.b32.xlu0 %v1630, 112
      %v1970 = vpop.permute.xlu0 %1969
      %1971 = vrot.lane.b32.xlu0 %v1628, 112
      %v1972 = vpop.permute.xlu0 %1971
      %1973 = vrot.lane.b32.xlu0 1.0, 112
      %v1974 = vpop.permute.xlu0 %1973
      %v1975 = vsel %vm336, %v1932, %v1934
      %v1976 = vsel %vm336, %v1934, %v1936
      %v1977 = vsel %vm336, %v1938, %v1940
      %v1978 = vsel %vm336, %v1940, %v1942
      %v1979 = vsel %vm336, %v1944, %v1946
      %v1980 = vsel %vm336, %v1946, %v1948
      %v1981 = vsel %vm336, %v1950, %v1952
      %v1982 = vsel %vm336, %v1952, %v1954
      %v1983 = vsel %vm336, %v1956, %v1958
      %v1984 = vsel %vm336, %v1958, %v1960
      %v1985 = vsel %vm336, %v1962, %v1964
      %v1986 = vsel %vm336, %v1964, %v1966
      %v1987 = vsel %vm336, %v1968, %v1970
      %v1988 = vsel %vm336, %v1970, %v1972
      %v2003 = vsel %vm409, %v1974, 0
      %2005 = vmatpush.msra.mxu0 0.0
      %2006 = vmatpush.msra.mxu0 0.0
      %2007 = vmatpush.msra.mxu0 0.0
      %2008 = vmatpush.msra.mxu0 0.0
      %2009 = vmatpush.msra.mxu0 0.0
      %2010 = vmatpush.msra.mxu0 0.0
      %2011 = vmatpush.msra.mxu0 %v2003
      %2012 = vmatpush.msra.mxu0 %v1987
      %2013 = vmatpush.msra.mxu0 %v1985
      %2014 = vmatpush.msra.mxu0 %v1983
      %2015 = vmatpush.msra.mxu0 %v1981
      %2016 = vmatpush.msra.mxu0 %v1979
      %2017 = vmatpush.msra.mxu0 %v1642
      %2018 = vmatpush.msra.mxu0 %v1977
      %2019 = vmatpush.msra.mxu0 %v1975
      %2020 = vmatpush.msra.mxu0 %v1605
      %2021 = vmatmul.f32.gmra.mxu0 %v1667
      %v2022 = vpop.f32.mrf.mxu0
      %v2023 = vadd.f32 0.0, %v2022
      %2024 = vdwg.mxu0
      %2025 = vmatpush.msra.mxu0 0.0
      %2026 = vmatpush.msra.mxu0 0.0
      %2027 = vmatpush.msra.mxu0 0.0
      %2028 = vmatpush.msra.mxu0 0.0
      %2029 = vmatpush.msra.mxu0 0.0
      %2030 = vmatpush.msra.mxu0 0.0
      %2031 = vmatpush.msra.mxu0 %v2003
      %2032 = vmatpush.msra.mxu0 %v1988
      %2033 = vmatpush.msra.mxu0 %v1986
      %2034 = vmatpush.msra.mxu0 %v1984
      %2035 = vmatpush.msra.mxu0 %v1982
      %2036 = vmatpush.msra.mxu0 %v1980
      %2037 = vmatpush.msra.mxu0 %v1643
      %2038 = vmatpush.msra.mxu0 %v1978
      %2039 = vmatpush.msra.mxu0 %v1976
      %2040 = vmatpush.msra.mxu0 %v1606
      %2041 = vmatmul.f32.gmra.mxu0 %v1667
      %v2042 = vpop.f32.mrf.mxu0
      %v2043 = vadd.f32 0.0, %v2042
      %2044 = vdwg.mxu0
      %v2045 = vmax.f32 %v2023, 0.0
      %v2046 = vmax.f32 %v2043, 0.0
      %v2047 = vmul.f32 %v1526, %v289
      %v2048 = vmul.f32 %v1522, %v293
      %v2049 = vmul.f32 %v1527, %v291
      %2050 = vrot.lane.b32.xlu0 %v1714, 127
      %v2051 = vpop.permute.xlu0 %2050
      %2052 = vrot.lane.b32.xlu0 %v1715, 127
      %v2053 = vpop.permute.xlu0 %2052
      %2054 = vrot.lane.b32.xlu0 %v1716, 127
      %v2055 = vpop.permute.xlu0 %2054
      %v2056 = vsel %vm308, %v2051, %v2053
      %v2057 = vsel %vm308, %v2053, %v2055
      %2058 = vrot.lane.b32.xlu0 %v1717, 127
      %v2059 = vpop.permute.xlu0 %2058
      %2060 = vrot.lane.b32.xlu0 %v1718, 127
      %v2061 = vpop.permute.xlu0 %2060
      %2062 = vrot.lane.b32.xlu0 %v1719, 127
      %v2063 = vpop.permute.xlu0 %2062
      %v2064 = vsel %vm308, %v2059, %v2061
      %v2065 = vsel %vm308, %v2061, %v2063
      %2069 = vrot.lane.b32.xlu0 %v2047, 111
      %v2070 = vpop.permute.xlu0 %2069
      %2071 = vrot.lane.b32.xlu0 %v2048, 111
      %v2072 = vpop.permute.xlu0 %2071
      %2073 = vrot.lane.b32.xlu0 %v2049, 111
      %v2074 = vpop.permute.xlu0 %2073
      %v2075 = vsel %vm347, %v2070, %v2072
      %v2076 = vsel %vm347, %v2072, %v2074
      %2077 = vrot.lane.b32.xlu0 %v2056, 111
      %v2078 = vpop.permute.xlu0 %2077
      %2079 = vrot.lane.b32.xlu0 %v2057, 111
      %v2080 = vpop.permute.xlu0 %2079
      %2081 = vrot.lane.b32.xlu0 %v2055, 111
      %v2082 = vpop.permute.xlu0 %2081
      %2083 = vrot.lane.b32.xlu0 %v2064, 111
      %v2084 = vpop.permute.xlu0 %2083
      %2085 = vrot.lane.b32.xlu0 %v2065, 111
      %v2086 = vpop.permute.xlu0 %2085
      %2087 = vrot.lane.b32.xlu0 %v2063, 111
      %v2088 = vpop.permute.xlu0 %2087
      %2089 = vrot.lane.b32.xlu0 %v1737, 111
      %v2090 = vpop.permute.xlu0 %2089
      %2091 = vrot.lane.b32.xlu0 %v1738, 111
      %v2092 = vpop.permute.xlu0 %2091
      %2093 = vrot.lane.b32.xlu0 %v1736, 111
      %v2094 = vpop.permute.xlu0 %2093
      %2095 = vrot.lane.b32.xlu0 %v1745, 111
      %v2096 = vpop.permute.xlu0 %2095
      %2097 = vrot.lane.b32.xlu0 %v1746, 111
      %v2098 = vpop.permute.xlu0 %2097
      %2099 = vrot.lane.b32.xlu0 %v1744, 111
      %v2100 = vpop.permute.xlu0 %2099
      %2101 = vrot.lane.b32.xlu0 %v2075, 111
      %v2102 = vpop.permute.xlu0 %2101
      %2103 = vrot.lane.b32.xlu0 %v2076, 111
      %v2104 = vpop.permute.xlu0 %2103
      %2105 = vrot.lane.b32.xlu0 %v2074, 111
      %v2106 = vpop.permute.xlu0 %2105
      %2107 = vrot.lane.b32.xlu0 1.0, 111
      %v2108 = vpop.permute.xlu0 %2107
      %v2109 = vsel %vm347, %v2078, %v2080
      %v2110 = vsel %vm347, %v2080, %v2082
      %v2111 = vsel %vm347, %v2084, %v2086
      %v2112 = vsel %vm347, %v2086, %v2088
      %v2113 = vsel %vm347, %v2090, %v2092
      %v2114 = vsel %vm347, %v2092, %v2094
      %v2115 = vsel %vm347, %v2096, %v2098
      %v2116 = vsel %vm347, %v2098, %v2100
      %v2117 = vsel %vm347, %v2102, %v2104
      %v2118 = vsel %vm347, %v2104, %v2106
      %v2129 = vsel %vm409, %v2108, 0
      %2131 = vmatpush.msra.mxu0 0.0
      %2132 = vmatpush.msra.mxu0 0.0
      %2133 = vmatpush.msra.mxu0 0.0
      %2134 = vmatpush.msra.mxu0 0.0
      %2135 = vmatpush.msra.mxu0 0.0
      %2136 = vmatpush.msra.mxu0 0.0
      %2137 = vmatpush.msra.mxu0 %v2129
      %2138 = vmatpush.msra.mxu0 %v2117
      %2139 = vmatpush.msra.mxu0 %v2115
      %2140 = vmatpush.msra.mxu0 %v2113
      %2141 = vmatpush.msra.mxu0 %v2111
      %2142 = vmatpush.msra.mxu0 %v1662
      %2143 = vmatpush.msra.mxu0 %v1652
      %2144 = vmatpush.msra.mxu0 %v2109
      %2145 = vmatpush.msra.mxu0 %v1629
      %2146 = vmatpush.msra.mxu0 %v1617
      %2147 = vmatmul.f32.gmra.mxu0 %v1667
      %v2148 = vpop.f32.mrf.mxu0
      %v2149 = vadd.f32 0.0, %v2148
      %2150 = vdwg.mxu0
      %2151 = vmatpush.msra.mxu0 0.0
      %2152 = vmatpush.msra.mxu0 0.0
      %2153 = vmatpush.msra.mxu0 0.0
      %2154 = vmatpush.msra.mxu0 0.0
      %2155 = vmatpush.msra.mxu0 0.0
      %2156 = vmatpush.msra.mxu0 0.0
      %2157 = vmatpush.msra.mxu0 %v2129
      %2158 = vmatpush.msra.mxu0 %v2118
      %2159 = vmatpush.msra.mxu0 %v2116
      %2160 = vmatpush.msra.mxu0 %v2114
      %2161 = vmatpush.msra.mxu0 %v2112
      %2162 = vmatpush.msra.mxu0 %v1663
      %2163 = vmatpush.msra.mxu0 %v1653
      %2164 = vmatpush.msra.mxu0 %v2110
      %2165 = vmatpush.msra.mxu0 %v1630
      %2166 = vmatpush.msra.mxu0 %v1618
      %2167 = vmatmul.f32.gmra.mxu0 %v1667
      %v2168 = vpop.f32.mrf.mxu0
      %v2169 = vadd.f32 0.0, %v2168
      %2170 = vdwg.mxu0
      %v2171 = vmax.f32 %v2149, 0.0
      %v2172 = vmax.f32 %v2169, 0.0
      %v2175 = vrot.slane %v1899, 5
      %v2176 = vrot.slane %v1900, 5
      %v2181 = vrot.slane %v2045, 2
      %v2182 = vrot.slane %v2046, 2
      %v2187 = vrot.slane %v2171, 7
      %v2188 = vrot.slane %v2172, 7
      %vm2191 = vcmask 1042432
      %v2192 = vsel %vm2191, %v1709, %v2175
      %v2193 = vsel %vm2191, %v1710, %v2176
      %vm2194 = vcmask 1045504
      %v2195 = vsel %vm2194, %v2192, %v2181
      %v2196 = vsel %vm2194, %v2193, %v2182
      %v2197 = vsel %vm409, %v2181, %v2187
      %v2198 = vsel %vm409, %v2182, %v2188
      %2199 = vst [vmem:[%s170] sm:$0xff] %v2195
      %2200 = vst [vmem:[%s170 + $0x8] sm:$0xff] %v2196
      %2201 = vst [vmem:[%s170 + $0x10] sm:$0xf] %v2197
      %2202 = vst [vmem:[%s170 + $0x18] sm:$0xf] %v2198
      %p2203 = scmp.lt.s32.totalorder %s14, 1
      %s2204 = scalar_select %p2203, %s14, 1
      %s2205 = smul.addr %s2204, 4
      %s2206 = smul.addr %s2205, 8
      %s2207 = scalar_lea.vmem %s3, %s2206
      // Predicated region
      $region33: #{_lambda_.1} parent=31 // pred_check
        %p2208 = pneg %p100
      $region34: #{_lambda_.1} parent=31 // pred_check_branch
        %2210 = sbr.rel (%p2208) target = $region36
      $region35: #{_lambda_.1} parent=31 // pred_region
        _
      $region36: #{_lambda_.1} parent=31 // pred_fallthru
        _
    $region32: #{_lambda_.1} parent=5 // pred_fallthru
      _
    %p2211 = scmp.le.s32.totalorder 2, %s9
    // Predicated region
    $region37: #{_lambda_.1} parent=5 // pred_check
      %p2212 = pneg %p2211
    $region38: #{_lambda_.1} parent=5 // pred_check_branch
      %2214 = sbr.rel (%p2212) target = $region40
    $region39: #{_lambda_.1} parent=5 // pred_region
      %s2215 = ssub.s32 %s9, 2
      // Predicated region
      $region41: #{_lambda_.1} parent=39 // pred_check
        %p2216 = pneg %p106
      $region42: #{_lambda_.1} parent=39 // pred_check_branch
        %2218 = sbr.rel (%p2216) target = $region44
      $region43: #{_lambda_.1} parent=39 // pred_region
        %p2219 = scmp.lt.s32.totalorder %s15, 1
        %s2220 = scalar_select %p2219, %s15, 1
        %s2221 = smul.addr %s2220, 4
        %s2222 = smul.addr %s2221, 8
        %s2223 = scalar_lea.vmem %s3, %s2222
      $region44: #{_lambda_.1} parent=39 // pred_fallthru
        _
    $region40: #{_lambda_.1} parent=5 // pred_fallthru
      _
  $region6: #{_lambda_.1} parent=0 // loop_footer
    %s13 = sadd.s32 1, %s9
  $region7: #{_lambda_.1} parent=0 // loop_footer_branch
    %8 = sbr.rel target = $region3
  $region8: #{_lambda_.1} parent=0 // loop_exit
    _

</llo_original>
